<compile_context>
chip_gen: v5e
topology: v5e:2x2
jax: 0.10.0
libtpu: 0.0.40
codegen_flags: <defaults>
</compile_context>

<pallas_src>
import functools

import jax
import jax.numpy as jnp
from jax.experimental import pallas as pl
from jax.experimental.pallas import tpu as pltpu

_LANE = 128
_GATE_ORDER = (0, 1, 3, 2)   # PyTorch (i, f, g, o) -> packed (i, f, o, g)


def _round_up(x, m):
    return (x + m - 1) // m * m


# ----------------------------- fused LSTM + decode kernel -------------------

def _lstm_kernel(x_ref, wih_ref, whh_ref, b_ref, wd_ref, bd_ref,
                 hs_ref, dec_ref, gx_scr, h_scr, c_scr, *, T, B, Hp, unroll):
    """One grid step == one chunk of T timesteps.

    x_ref   : (T*B, D)    inputs of this chunk, flattened over (time, batch)
    wih_ref : (D, 4*Hp)   gate-packed/padded W_ih^T       (order i, f, o, g)
    whh_ref : (Hp, 4*Hp)  gate-packed/padded W_hh^T
    b_ref   : (1, 4*Hp)   gate-packed/padded (b_ih + b_hh)
    wd_ref  : (Hp, Op)    padded W_D^T
    bd_ref  : (1, Op)     padded b_D
    hs_ref  : (T*B, Hp)   stacked hidden states for this chunk
    dec_ref : (B, Op)     tanh(linearD(h_last)), written on the last chunk
    gx_scr  : (T*B, 4*Hp) VMEM scratch for the hoisted input projection
    h_scr/c_scr : (B, Hp) VMEM scratch carries, persist across chunks
    """
    chunk = pl.program_id(0)

    @pl.when(chunk == 0)
    def _():
        h_scr[...] = jnp.zeros_like(h_scr)
        c_scr[...] = jnp.zeros_like(c_scr)

    # Hoisted input projection for the whole chunk (bias folded in).  Staged
    # into VMEM scratch so the (T*B, 4Hp) result is not live in vregs across
    # the serial recurrence (avoids spill st/ld on the critical path).
    gx_scr[...] = (jnp.dot(x_ref[...], wih_ref[...],
                           preferred_element_type=jnp.float32)
                   + b_ref[...])                                   # (T*B, 4Hp)

    def step(t, carry):
        h, c = carry
        row = pl.multiple_of(t * B, B)                # sublane-aligned (B % 8 == 0)
        # whh_ref is read inside the loop: the MXU RHS streams from VMEM, no
        # 64-vreg materialization of the (Hp, 4Hp) weight block.
        gates = gx_scr[pl.ds(row, B), :] + jnp.dot(
            h, whh_ref[...], preferred_element_type=jnp.float32)   # (B, 4Hp)
        # Packed order (i, f, o, g): one wide sigmoid over the first 3*Hp
        # lanes, one tanh over the last Hp.  All slices are vreg-aligned.
        sig = jax.nn.sigmoid(gates[:, :3 * Hp])
        g_g = jnp.tanh(gates[:, 3 * Hp:])
        i_g = sig[:, 0 * Hp:1 * Hp]
        f_g = sig[:, 1 * Hp:2 * Hp]
        o_g = sig[:, 2 * Hp:3 * Hp]
        c = f_g * c + i_g * g_g
        h = o_g * jnp.tanh(c)
        hs_ref[pl.ds(row, B), :] = h.astype(hs_ref.dtype)          # lane-dense
        return h, c

    h, c = jax.lax.fori_loop(0, T, step, (h_scr[...], c_scr[...]),
                             unroll=unroll)
    h_scr[...] = h
    c_scr[...] = c

    # Fused decode on the final hidden state (padded rows/cols of W_D^T are 0).
    @pl.when(chunk == pl.num_programs(0) - 1)
    def _():
        dec_ref[...] = jnp.tanh(
            jnp.dot(h, wd_ref[...], preferred_element_type=jnp.float32)
            + bd_ref[...]
        ).astype(dec_ref.dtype)


# ----------------------------- wrappers --------------------------------------

def _pack_gate_rows(w, H, Hp):
    """(4H, C) in PyTorch order (i,f,g,o) -> (4Hp, C) in packed order (i,f,o,g),
    each gate's H rows placed at offset g*Hp, zero-padded to Hp rows."""
    cols = w.shape[1]
    w4 = w.reshape(4, H, cols)[jnp.array(_GATE_ORDER), :, :]
    w4 = jnp.pad(w4, ((0, 0), (0, Hp - H), (0, 0)))
    return w4.reshape(4 * Hp, cols)


def _pick_chunk_steps(L, B, D, Hp, budget_bytes=8 << 20):
    """Largest divisor T of L with n_chunks >= 2 (enables double-buffering of
    the x/hs blocks) whose per-chunk buffers fit the VMEM budget."""
    # f32 bytes per timestep: double-buffered x in + hs out, single gx scratch.
    per_step = 4 * B * (2 * D + 2 * Hp + 4 * Hp)
    max_t = max(1, budget_bytes // per_step)
    candidates = [t for t in range(1, L + 1)
                  if L % t == 0 and t <= max_t and L // t >= 2]
    return max(candidates) if candidates else min(L, max_t)


def lstm_forward_and_decode(x, w_ih, w_hh, b_ih, b_hh, w_d, b_d,
                            *, chunk_steps=None):
    """x: (L, B, D) f32 -> (hs: (L, B, H) f32, dec: (B, O) f32)."""
    L, B, D = x.shape
    H = w_ih.shape[0] // 4
    O = w_d.shape[0]
    Hp = _round_up(H, _LANE)                      # lane-aligned hidden dim
    Op = _round_up(O, _LANE)                      # lane-aligned decode dim

    T = _pick_chunk_steps(L, B, D, Hp) if chunk_steps is None else chunk_steps
    assert L % T == 0, "sequence length must be divisible by chunk_steps"
    n_chunks = L // T
    unroll = min(T, 4)

    # Padded, pre-transposed parameters (built once in XLA, outside the kernel).
    wih_t = _pack_gate_rows(w_ih, H, Hp).T                         # (D, 4Hp)
    whh_t = _pack_gate_rows(jnp.pad(w_hh, ((0, 0), (0, Hp - H))), H, Hp).T  # (Hp, 4Hp)
    bias = jnp.pad((b_ih + b_hh).reshape(4, H)[jnp.array(_GATE_ORDER), :],
                   ((0, 0), (0, Hp - H))).reshape(1, 4 * Hp)       # (1, 4Hp)
    wd_t = jnp.pad(w_d, ((0, Op - O), (0, Hp - H))).T              # (Hp, Op)
    bd = jnp.pad(b_d, (0, Op - O)).reshape(1, Op)                  # (1, Op)

    x_flat = x.reshape(L * B, D)

    hs_flat, dec_p = pl.pallas_call(
        functools.partial(_lstm_kernel, T=T, B=B, Hp=Hp, unroll=unroll),
        out_shape=(
            jax.ShapeDtypeStruct((L * B, Hp), jnp.float32),
            jax.ShapeDtypeStruct((B, Op), jnp.float32),
        ),
        grid_spec=pltpu.PrefetchScalarGridSpec(
            num_scalar_prefetch=0,
            grid=(n_chunks,),
            in_specs=[
                pl.BlockSpec((T * B, D), lambda c: (c, 0)),
                pl.BlockSpec((D, 4 * Hp), lambda c: (0, 0)),
                pl.BlockSpec((Hp, 4 * Hp), lambda c: (0, 0)),
                pl.BlockSpec((1, 4 * Hp), lambda c: (0, 0)),
                pl.BlockSpec((Hp, Op), lambda c: (0, 0)),
                pl.BlockSpec((1, Op), lambda c: (0, 0)),
            ],
            out_specs=[
                pl.BlockSpec((T * B, Hp), lambda c: (c, 0)),
                pl.BlockSpec((B, Op), lambda c: (0, 0)),
            ],
            scratch_shapes=[
                pltpu.VMEM((T * B, 4 * Hp), jnp.float32),  # staged gx
                pltpu.VMEM((B, Hp), jnp.float32),          # h carry
                pltpu.VMEM((B, Hp), jnp.float32),          # c carry
            ],
        ),
        compiler_params=pltpu.CompilerParams(
            # Recurrence is carried through h/c scratch across grid steps:
            # the chunk axis MUST stay "arbitrary".
            dimension_semantics=("arbitrary",),
            # Above v5e's 16 MiB scoped default, below v7x's 64 MiB physical.
            vmem_limit_bytes=48 * 1024 * 1024,
        ),
    )(x_flat, wih_t, whh_t, bias, wd_t, bd)

    hs = hs_flat.reshape(L, B, Hp)[:, :, :H]
    dec = dec_p[:, :O]
    return hs, dec


# ----------------------------- pure-JAX reference ---------------------------

def lstm_forward_ref(x, w_ih, w_hh, b_ih, b_hh):
    L, B, D = x.shape
    H = w_hh.shape[1]

    def step(carry, x_t):
        h, c = carry
        gates = x_t @ w_ih.T + b_ih + h @ w_hh.T + b_hh
        i_g, f_g, g_g, o_g = jnp.split(gates, 4, axis=-1)
        i_g = jax.nn.sigmoid(i_g)
        f_g = jax.nn.sigmoid(f_g)
        g_g = jnp.tanh(g_g)
        o_g = jax.nn.sigmoid(o_g)
        c_new = f_g * c + i_g * g_g
        h_new = o_g * jnp.tanh(c_new)
        return (h_new, c_new), h_new

    init = (jnp.zeros((B, H), jnp.float32), jnp.zeros((B, H), jnp.float32))
    _, hs = jax.lax.scan(step, init, x)
    return hs


# ----------------------------- main ------------------------------------------

if __name__ == "__main__":
    # Small shapes consistent with the module's forward(): x is (L, B, D_in).
    length, batch = 8, 8
    input_dim, latent_dim, output_dim = 16, 32, 16

    key = jax.random.PRNGKey(0)
    k = jax.random.split(key, 8)
    bound = 1.0 / jnp.sqrt(latent_dim)  # PyTorch LSTMCell / Linear init scale

    x = jax.random.normal(k[0], (length, batch, input_dim), jnp.float32)
    w_ih = jax.random.uniform(k[1], (4 * latent_dim, input_dim), jnp.float32,
                              -bound, bound)
    w_hh = jax.random.uniform(k[2], (4 * latent_dim, latent_dim), jnp.float32,
                              -bound, bound)
    b_ih = jax.random.uniform(k[3], (4 * latent_dim,), jnp.float32, -bound, bound)
    b_hh = jax.random.uniform(k[4], (4 * latent_dim,), jnp.float32, -bound, bound)
    w_d = jax.random.uniform(k[5], (output_dim, latent_dim), jnp.float32,
                             -bound, bound)
    b_d = jax.random.uniform(k[6], (output_dim,), jnp.float32, -bound, bound)

    hs, dec = jax.block_until_ready(
        lstm_forward_and_decode(x, w_ih, w_hh, b_ih, b_hh, w_d, b_d))

    # forward() -> (length, batch, latent_dim)
    hs_ref = lstm_forward_ref(x, w_ih, w_hh, b_ih, b_hh)
    assert hs.shape == (length, batch, latent_dim)
    assert jnp.allclose(hs, hs_ref, atol=1e-5, rtol=1e-5)

    # decode() on the final hidden state -> (batch, output_dim)
    dec_ref = jnp.tanh(hs_ref[-1] @ w_d.T + b_d)
    assert dec.shape == (batch, output_dim)
    assert jnp.allclose(dec, dec_ref, atol=1e-5, rtol=1e-5)

    print("KERNEL_OK")
</pallas_src>

<mosaic_0001>
module attributes {stable_mosaic.version = 11 : i64} {
  func.func @_lstm_kernel(%arg0: i32, %arg1: memref<32x16xf32, #tpu.memory_space<vmem>>, %arg2: memref<16x512xf32, #tpu.memory_space<vmem>>, %arg3: memref<128x512xf32, #tpu.memory_space<vmem>>, %arg4: memref<1x512xf32, #tpu.memory_space<vmem>>, %arg5: memref<128x128xf32, #tpu.memory_space<vmem>>, %arg6: memref<1x128xf32, #tpu.memory_space<vmem>>, %arg7: memref<32x128xf32, #tpu.memory_space<vmem>>, %arg8: memref<8x128xf32, #tpu.memory_space<vmem>>, %arg9: memref<32x512xf32, #tpu.memory_space<vmem>>, %arg10: memref<8x128xf32, #tpu.memory_space<vmem>>, %arg11: memref<8x128xf32, #tpu.memory_space<vmem>>) attributes {dimension_semantics = [#tpu.dimension_semantics<arbitrary>], iteration_bounds = array<i64: 2>, scalar_prefetch = 0 : i64, scratch_operands = 3 : i64, tpu.core_type = #tpu.core_type<tc>, window_params = [{transform_indices = @transform_0, window_bounds = array<i64: 32, 16>}, {pipeline_mode = #tpu.pipeline_mode<synchronous>, transform_indices = @transform_1, window_bounds = array<i64: 16, 512>}, {pipeline_mode = #tpu.pipeline_mode<synchronous>, transform_indices = @transform_2, window_bounds = array<i64: 128, 512>}, {pipeline_mode = #tpu.pipeline_mode<synchronous>, transform_indices = @transform_3, window_bounds = array<i64: 1, 512>}, {pipeline_mode = #tpu.pipeline_mode<synchronous>, transform_indices = @transform_4, window_bounds = array<i64: 128, 128>}, {pipeline_mode = #tpu.pipeline_mode<synchronous>, transform_indices = @transform_5, window_bounds = array<i64: 1, 128>}, {transform_indices = @transform_6, window_bounds = array<i64: 32, 128>}, {pipeline_mode = #tpu.pipeline_mode<synchronous>, transform_indices = @transform_7, window_bounds = array<i64: 8, 128>}]} {
    %c0_i32 = arith.constant 0 : i32
    %0 = arith.cmpi eq, %arg0, %c0_i32 : i32
    %1 = arith.extui %0 : i1 to i32
    %c0_i32_0 = arith.constant 0 : i32
    %2 = arith.cmpi ne, %1, %c0_i32_0 : i32
    scf.if %2 {
      %cst_46 = arith.constant 0.000000e+00 : f32
      %117 = vector.broadcast %cst_46 : f32 to vector<8x128xf32>
      %c0_47 = arith.constant 0 : index
      %c0_48 = arith.constant 0 : index
      %118 = vector.load %arg10[%c0_47, %c0_48] : memref<8x128xf32, #tpu.memory_space<vmem>>, vector<8x128xf32>
      tpu.vector_store %arg10[%c0_47, %c0_48], %117 {strides = array<i32>} : memref<8x128xf32, #tpu.memory_space<vmem>>, vector<8x128xf32>,
      %cst_49 = arith.constant 0.000000e+00 : f32
      %119 = vector.broadcast %cst_49 : f32 to vector<8x128xf32>
      %c0_50 = arith.constant 0 : index
      %c0_51 = arith.constant 0 : index
      %120 = vector.load %arg11[%c0_50, %c0_51] : memref<8x128xf32, #tpu.memory_space<vmem>>, vector<8x128xf32>
      tpu.vector_store %arg11[%c0_50, %c0_51], %119 {strides = array<i32>} : memref<8x128xf32, #tpu.memory_space<vmem>>, vector<8x128xf32>,
    } else {
    }
    %c0 = arith.constant 0 : index
    %c0_1 = arith.constant 0 : index
    %3 = vector.load %arg1[%c0, %c0_1] : memref<32x16xf32, #tpu.memory_space<vmem>>, vector<32x16xf32>
    %c0_2 = arith.constant 0 : index
    %c0_3 = arith.constant 0 : index
    %4 = vector.load %arg2[%c0_2, %c0_3] : memref<16x512xf32, #tpu.memory_space<vmem>>, vector<16x512xf32>
    %cst = arith.constant dense<0.000000e+00> : vector<32x512xf32>
    %5 = tpu.matmul %3, %4, %cst {dimension_numbers = #tpu.dot_dimension_numbers<[1], [0], [0], [1], [0, 0, 1, 1], [], []>} : vector<32x16xf32>, vector<16x512xf32>, vector<32x512xf32> -> vector<32x512xf32>
    %c0_4 = arith.constant 0 : index
    %c0_5 = arith.constant 0 : index
    %6 = vector.load %arg4[%c0_4, %c0_5] : memref<1x512xf32, #tpu.memory_space<vmem>>, vector<1x512xf32>
    %7 = vector.broadcast %6 : vector<1x512xf32> to vector<32x512xf32>
    %8 = arith.addf %5, %7 : vector<32x512xf32>
    %c0_6 = arith.constant 0 : index
    %c0_7 = arith.constant 0 : index
    %9 = vector.load %arg9[%c0_6, %c0_7] : memref<32x512xf32, #tpu.memory_space<vmem>>, vector<32x512xf32>
    tpu.vector_store %arg9[%c0_6, %c0_7], %8 {strides = array<i32>} : memref<32x512xf32, #tpu.memory_space<vmem>>, vector<32x512xf32>,
    %c0_8 = arith.constant 0 : index
    %c0_9 = arith.constant 0 : index
    %10 = vector.load %arg10[%c0_8, %c0_9] : memref<8x128xf32, #tpu.memory_space<vmem>>, vector<8x128xf32>
    %c0_10 = arith.constant 0 : index
    %c0_11 = arith.constant 0 : index
    %11 = vector.load %arg11[%c0_10, %c0_11] : memref<8x128xf32, #tpu.memory_space<vmem>>, vector<8x128xf32>
    %c0_i32_12 = arith.constant 0 : i32
    %c8_i32 = arith.constant 8 : i32
    %12 = arith.muli %c0_i32_12, %c8_i32 : i32
    %13 = tpu.assume_multiple %12, 8 : i32
    %14 = arith.index_cast %13 : i32 to index
    %c0_13 = arith.constant 0 : index
    %15 = vector.load %arg9[%14, %c0_13] : memref<32x512xf32, #tpu.memory_space<vmem>>, vector<8x512xf32>
    %c0_14 = arith.constant 0 : index
    %c0_15 = arith.constant 0 : index
    %16 = vector.load %arg3[%c0_14, %c0_15] : memref<128x512xf32, #tpu.memory_space<vmem>>, vector<128x512xf32>
    %cst_16 = arith.constant dense<0.000000e+00> : vector<8x512xf32>
    %17 = tpu.matmul %10, %16, %cst_16 {dimension_numbers = #tpu.dot_dimension_numbers<[1], [0], [0], [1], [0, 0, 1, 1], [], []>} : vector<8x128xf32>, vector<128x512xf32>, vector<8x512xf32> -> vector<8x512xf32>
    %18 = arith.addf %15, %17 : vector<8x512xf32>
    %19 = vector.extract_strided_slice %18 {offsets = [0, 0], sizes = [8, 384], strides = [1, 1]} : vector<8x512xf32> to vector<8x384xf32>
    %20 = arith.negf %19 : vector<8x384xf32>
    %21 = math.exp %20 : vector<8x384xf32>
    %cst_17 = arith.constant 1.000000e+00 : f32
    %22 = vector.broadcast %cst_17 : f32 to vector<8x384xf32>
    %23 = arith.addf %22, %21 : vector<8x384xf32>
    %24 = arith.divf %22, %23 : vector<8x384xf32>
    %25 = vector.extract_strided_slice %18 {offsets = [0, 384], sizes = [8, 128], strides = [1, 1]} : vector<8x512xf32> to vector<8x128xf32>
    %26 = math.tanh %25 : vector<8x128xf32>
    %27 = vector.extract_strided_slice %24 {offsets = [0, 0], sizes = [8, 128], strides = [1, 1]} : vector<8x384xf32> to vector<8x128xf32>
    %28 = vector.extract_strided_slice %24 {offsets = [0, 128], sizes = [8, 128], strides = [1, 1]} : vector<8x384xf32> to vector<8x128xf32>
    %29 = vector.extract_strided_slice %24 {offsets = [0, 256], sizes = [8, 128], strides = [1, 1]} : vector<8x384xf32> to vector<8x128xf32>
    %30 = arith.mulf %28, %11 : vector<8x128xf32>
    %31 = arith.mulf %27, %26 : vector<8x128xf32>
    %32 = arith.addf %30, %31 : vector<8x128xf32>
    %33 = math.tanh %32 : vector<8x128xf32>
    %34 = arith.mulf %29, %33 : vector<8x128xf32>
    %35 = arith.index_cast %13 : i32 to index
    %c0_18 = arith.constant 0 : index
    %36 = vector.load %arg7[%35, %c0_18] : memref<32x128xf32, #tpu.memory_space<vmem>>, vector<8x128xf32>
    tpu.vector_store %arg7[%35, %c0_18], %34 {strides = array<i32>} : memref<32x128xf32, #tpu.memory_space<vmem>>, vector<8x128xf32>,
    %c1_i32 = arith.constant 1 : i32
    %c8_i32_19 = arith.constant 8 : i32
    %37 = arith.muli %c1_i32, %c8_i32_19 : i32
    %38 = tpu.assume_multiple %37, 8 : i32
    %39 = arith.index_cast %38 : i32 to index
    %c0_20 = arith.constant 0 : index
    %40 = vector.load %arg9[%39, %c0_20] : memref<32x512xf32, #tpu.memory_space<vmem>>, vector<8x512xf32>
    %c0_21 = arith.constant 0 : index
    %c0_22 = arith.constant 0 : index
    %41 = vector.load %arg3[%c0_21, %c0_22] : memref<128x512xf32, #tpu.memory_space<vmem>>, vector<128x512xf32>
    %cst_23 = arith.constant dense<0.000000e+00> : vector<8x512xf32>
    %42 = tpu.matmul %34, %41, %cst_23 {dimension_numbers = #tpu.dot_dimension_numbers<[1], [0], [0], [1], [0, 0, 1, 1], [], []>} : vector<8x128xf32>, vector<128x512xf32>, vector<8x512xf32> -> vector<8x512xf32>
    %43 = arith.addf %40, %42 : vector<8x512xf32>
    %44 = vector.extract_strided_slice %43 {offsets = [0, 0], sizes = [8, 384], strides = [1, 1]} : vector<8x512xf32> to vector<8x384xf32>
    %45 = arith.negf %44 : vector<8x384xf32>
    %46 = math.exp %45 : vector<8x384xf32>
    %cst_24 = arith.constant 1.000000e+00 : f32
    %47 = vector.broadcast %cst_24 : f32 to vector<8x384xf32>
    %48 = arith.addf %47, %46 : vector<8x384xf32>
    %49 = arith.divf %47, %48 : vector<8x384xf32>
    %50 = vector.extract_strided_slice %43 {offsets = [0, 384], sizes = [8, 128], strides = [1, 1]} : vector<8x512xf32> to vector<8x128xf32>
    %51 = math.tanh %50 : vector<8x128xf32>
    %52 = vector.extract_strided_slice %49 {offsets = [0, 0], sizes = [8, 128], strides = [1, 1]} : vector<8x384xf32> to vector<8x128xf32>
    %53 = vector.extract_strided_slice %49 {offsets = [0, 128], sizes = [8, 128], strides = [1, 1]} : vector<8x384xf32> to vector<8x128xf32>
    %54 = vector.extract_strided_slice %49 {offsets = [0, 256], sizes = [8, 128], strides = [1, 1]} : vector<8x384xf32> to vector<8x128xf32>
    %55 = arith.mulf %53, %32 : vector<8x128xf32>
    %56 = arith.mulf %52, %51 : vector<8x128xf32>
    %57 = arith.addf %55, %56 : vector<8x128xf32>
    %58 = math.tanh %57 : vector<8x128xf32>
    %59 = arith.mulf %54, %58 : vector<8x128xf32>
    %60 = arith.index_cast %38 : i32 to index
    %c0_25 = arith.constant 0 : index
    %61 = vector.load %arg7[%60, %c0_25] : memref<32x128xf32, #tpu.memory_space<vmem>>, vector<8x128xf32>
    tpu.vector_store %arg7[%60, %c0_25], %59 {strides = array<i32>} : memref<32x128xf32, #tpu.memory_space<vmem>>, vector<8x128xf32>,
    %c2_i32 = arith.constant 2 : i32
    %c8_i32_26 = arith.constant 8 : i32
    %62 = arith.muli %c2_i32, %c8_i32_26 : i32
    %63 = tpu.assume_multiple %62, 8 : i32
    %64 = arith.index_cast %63 : i32 to index
    %c0_27 = arith.constant 0 : index
    %65 = vector.load %arg9[%64, %c0_27] : memref<32x512xf32, #tpu.memory_space<vmem>>, vector<8x512xf32>
    %c0_28 = arith.constant 0 : index
    %c0_29 = arith.constant 0 : index
    %66 = vector.load %arg3[%c0_28, %c0_29] : memref<128x512xf32, #tpu.memory_space<vmem>>, vector<128x512xf32>
    %cst_30 = arith.constant dense<0.000000e+00> : vector<8x512xf32>
    %67 = tpu.matmul %59, %66, %cst_30 {dimension_numbers = #tpu.dot_dimension_numbers<[1], [0], [0], [1], [0, 0, 1, 1], [], []>} : vector<8x128xf32>, vector<128x512xf32>, vector<8x512xf32> -> vector<8x512xf32>
    %68 = arith.addf %65, %67 : vector<8x512xf32>
    %69 = vector.extract_strided_slice %68 {offsets = [0, 0], sizes = [8, 384], strides = [1, 1]} : vector<8x512xf32> to vector<8x384xf32>
    %70 = arith.negf %69 : vector<8x384xf32>
    %71 = math.exp %70 : vector<8x384xf32>
    %cst_31 = arith.constant 1.000000e+00 : f32
    %72 = vector.broadcast %cst_31 : f32 to vector<8x384xf32>
    %73 = arith.addf %72, %71 : vector<8x384xf32>
    %74 = arith.divf %72, %73 : vector<8x384xf32>
    %75 = vector.extract_strided_slice %68 {offsets = [0, 384], sizes = [8, 128], strides = [1, 1]} : vector<8x512xf32> to vector<8x128xf32>
    %76 = math.tanh %75 : vector<8x128xf32>
    %77 = vector.extract_strided_slice %74 {offsets = [0, 0], sizes = [8, 128], strides = [1, 1]} : vector<8x384xf32> to vector<8x128xf32>
    %78 = vector.extract_strided_slice %74 {offsets = [0, 128], sizes = [8, 128], strides = [1, 1]} : vector<8x384xf32> to vector<8x128xf32>
    %79 = vector.extract_strided_slice %74 {offsets = [0, 256], sizes = [8, 128], strides = [1, 1]} : vector<8x384xf32> to vector<8x128xf32>
    %80 = arith.mulf %78, %57 : vector<8x128xf32>
    %81 = arith.mulf %77, %76 : vector<8x128xf32>
    %82 = arith.addf %80, %81 : vector<8x128xf32>
    %83 = math.tanh %82 : vector<8x128xf32>
    %84 = arith.mulf %79, %83 : vector<8x128xf32>
    %85 = arith.index_cast %63 : i32 to index
    %c0_32 = arith.constant 0 : index
    %86 = vector.load %arg7[%85, %c0_32] : memref<32x128xf32, #tpu.memory_space<vmem>>, vector<8x128xf32>
    tpu.vector_store %arg7[%85, %c0_32], %84 {strides = array<i32>} : memref<32x128xf32, #tpu.memory_space<vmem>>, vector<8x128xf32>,
    %c3_i32 = arith.constant 3 : i32
    %c8_i32_33 = arith.constant 8 : i32
    %87 = arith.muli %c3_i32, %c8_i32_33 : i32
    %88 = tpu.assume_multiple %87, 8 : i32
    %89 = arith.index_cast %88 : i32 to index
    %c0_34 = arith.constant 0 : index
    %90 = vector.load %arg9[%89, %c0_34] : memref<32x512xf32, #tpu.memory_space<vmem>>, vector<8x512xf32>
    %c0_35 = arith.constant 0 : index
    %c0_36 = arith.constant 0 : index
    %91 = vector.load %arg3[%c0_35, %c0_36] : memref<128x512xf32, #tpu.memory_space<vmem>>, vector<128x512xf32>
    %cst_37 = arith.constant dense<0.000000e+00> : vector<8x512xf32>
    %92 = tpu.matmul %84, %91, %cst_37 {dimension_numbers = #tpu.dot_dimension_numbers<[1], [0], [0], [1], [0, 0, 1, 1], [], []>} : vector<8x128xf32>, vector<128x512xf32>, vector<8x512xf32> -> vector<8x512xf32>
    %93 = arith.addf %90, %92 : vector<8x512xf32>
    %94 = vector.extract_strided_slice %93 {offsets = [0, 0], sizes = [8, 384], strides = [1, 1]} : vector<8x512xf32> to vector<8x384xf32>
    %95 = arith.negf %94 : vector<8x384xf32>
    %96 = math.exp %95 : vector<8x384xf32>
    %cst_38 = arith.constant 1.000000e+00 : f32
    %97 = vector.broadcast %cst_38 : f32 to vector<8x384xf32>
    %98 = arith.addf %97, %96 : vector<8x384xf32>
    %99 = arith.divf %97, %98 : vector<8x384xf32>
    %100 = vector.extract_strided_slice %93 {offsets = [0, 384], sizes = [8, 128], strides = [1, 1]} : vector<8x512xf32> to vector<8x128xf32>
    %101 = math.tanh %100 : vector<8x128xf32>
    %102 = vector.extract_strided_slice %99 {offsets = [0, 0], sizes = [8, 128], strides = [1, 1]} : vector<8x384xf32> to vector<8x128xf32>
    %103 = vector.extract_strided_slice %99 {offsets = [0, 128], sizes = [8, 128], strides = [1, 1]} : vector<8x384xf32> to vector<8x128xf32>
    %104 = vector.extract_strided_slice %99 {offsets = [0, 256], sizes = [8, 128], strides = [1, 1]} : vector<8x384xf32> to vector<8x128xf32>
    %105 = arith.mulf %103, %82 : vector<8x128xf32>
    %106 = arith.mulf %102, %101 : vector<8x128xf32>
    %107 = arith.addf %105, %106 : vector<8x128xf32>
    %108 = math.tanh %107 : vector<8x128xf32>
    %109 = arith.mulf %104, %108 : vector<8x128xf32>
    %110 = arith.index_cast %88 : i32 to index
    %c0_39 = arith.constant 0 : index
    %111 = vector.load %arg7[%110, %c0_39] : memref<32x128xf32, #tpu.memory_space<vmem>>, vector<8x128xf32>
    tpu.vector_store %arg7[%110, %c0_39], %109 {strides = array<i32>} : memref<32x128xf32, #tpu.memory_space<vmem>>, vector<8x128xf32>,
    %c4_i32 = arith.constant 4 : i32
    %c0_40 = arith.constant 0 : index
    %c0_41 = arith.constant 0 : index
    %112 = vector.load %arg10[%c0_40, %c0_41] : memref<8x128xf32, #tpu.memory_space<vmem>>, vector<8x128xf32>
    tpu.vector_store %arg10[%c0_40, %c0_41], %109 {strides = array<i32>} : memref<8x128xf32, #tpu.memory_space<vmem>>, vector<8x128xf32>,
    %c0_42 = arith.constant 0 : index
    %c0_43 = arith.constant 0 : index
    %113 = vector.load %arg11[%c0_42, %c0_43] : memref<8x128xf32, #tpu.memory_space<vmem>>, vector<8x128xf32>
    tpu.vector_store %arg11[%c0_42, %c0_43], %107 {strides = array<i32>} : memref<8x128xf32, #tpu.memory_space<vmem>>, vector<8x128xf32>,
    %c1_i32_44 = arith.constant 1 : i32
    %114 = arith.cmpi eq, %arg0, %c1_i32_44 : i32
    %115 = arith.extui %114 : i1 to i32
    %c0_i32_45 = arith.constant 0 : i32
    %116 = arith.cmpi ne, %115, %c0_i32_45 : i32
    scf.if %116 {
      %c0_46 = arith.constant 0 : index
      %c0_47 = arith.constant 0 : index
      %117 = vector.load %arg5[%c0_46, %c0_47] : memref<128x128xf32, #tpu.memory_space<vmem>>, vector<128x128xf32>
      %cst_48 = arith.constant dense<0.000000e+00> : vector<8x128xf32>
      %118 = tpu.matmul %109, %117, %cst_48 {dimension_numbers = #tpu.dot_dimension_numbers<[1], [0], [0], [1], [0, 0, 1, 1], [], []>} : vector<8x128xf32>, vector<128x128xf32>, vector<8x128xf32> -> vector<8x128xf32>
      %c0_49 = arith.constant 0 : index
      %c0_50 = arith.constant 0 : index
      %119 = vector.load %arg6[%c0_49, %c0_50] : memref<1x128xf32, #tpu.memory_space<vmem>>, vector<1x128xf32>
      %120 = vector.broadcast %119 : vector<1x128xf32> to vector<8x128xf32>
      %121 = arith.addf %118, %120 : vector<8x128xf32>
      %122 = math.tanh %121 : vector<8x128xf32>
      %c0_51 = arith.constant 0 : index
      %c0_52 = arith.constant 0 : index
      %123 = vector.load %arg8[%c0_51, %c0_52] : memref<8x128xf32, #tpu.memory_space<vmem>>, vector<8x128xf32>
      tpu.vector_store %arg8[%c0_51, %c0_52], %122 {strides = array<i32>} : memref<8x128xf32, #tpu.memory_space<vmem>>, vector<8x128xf32>,
    } else {
    }
    return
  }
  func.func @transform_0(%arg0: i32) -> (i32, i32) {
    %c0_i32 = arith.constant 0 : i32
    %c0_i32_0 = arith.constant 0 : i32
    return %arg0, %c0_i32 : i32, i32
  }
  func.func @transform_1(%arg0: i32) -> (i32, i32) {
    %c0_i32 = arith.constant 0 : i32
    %c0_i32_0 = arith.constant 0 : i32
    %c0_i32_1 = arith.constant 0 : i32
    return %c0_i32, %c0_i32_0 : i32, i32
  }
  func.func @transform_2(%arg0: i32) -> (i32, i32) {
    %c0_i32 = arith.constant 0 : i32
    %c0_i32_0 = arith.constant 0 : i32
    %c0_i32_1 = arith.constant 0 : i32
    return %c0_i32, %c0_i32_0 : i32, i32
  }
  func.func @transform_3(%arg0: i32) -> (i32, i32) {
    %c0_i32 = arith.constant 0 : i32
    %c0_i32_0 = arith.constant 0 : i32
    %c0_i32_1 = arith.constant 0 : i32
    return %c0_i32, %c0_i32_0 : i32, i32
  }
  func.func @transform_4(%arg0: i32) -> (i32, i32) {
    %c0_i32 = arith.constant 0 : i32
    %c0_i32_0 = arith.constant 0 : i32
    %c0_i32_1 = arith.constant 0 : i32
    return %c0_i32, %c0_i32_0 : i32, i32
  }
  func.func @transform_5(%arg0: i32) -> (i32, i32) {
    %c0_i32 = arith.constant 0 : i32
    %c0_i32_0 = arith.constant 0 : i32
    %c0_i32_1 = arith.constant 0 : i32
    return %c0_i32, %c0_i32_0 : i32, i32
  }
  func.func @transform_6(%arg0: i32) -> (i32, i32) {
    %c0_i32 = arith.constant 0 : i32
    %c0_i32_0 = arith.constant 0 : i32
    return %arg0, %c0_i32 : i32, i32
  }
  func.func @transform_7(%arg0: i32) -> (i32, i32) {
    %c0_i32 = arith.constant 0 : i32
    %c0_i32_0 = arith.constant 0 : i32
    %c0_i32_1 = arith.constant 0 : i32
    return %c0_i32, %c0_i32_0 : i32, i32
  }
}

</mosaic_0001>

<llo_original>
// kernel: tpu_custom_call.1
$region0: #{tpu_custom_call.1}
  #allocation0 [shape = 'u32[]', space=smem, size = 0x4, offset = 0x4, fixed_abs, tag = 'smem constant byte address 0x4 - core index']
  #allocation1 [shape = 'u32[72,128]{1,0:T(1,128)}', space=vmem, size = 0x9000, scoped, tag = 'internal scratch']
  #allocation2 [shape = 'f32[32,512]{1,0:T(8,128)}', space=vmem, size = 0x10000, scoped, tag = 'scratch operand']
  #allocation3 [shape = 'f32[8,128]{1,0:T(8,128)}', space=vmem, size = 0x1000, scoped, tag = 'scratch operand']
  #allocation4 [shape = 'f32[8,128]{1,0:T(8,128)}', space=vmem, size = 0x1000, scoped, tag = 'scratch operand']
  %s0 = inlined_call_operand.vmem [shape: f32[64,16], index: 0, kind: input, shape index: {}]
  %s1 = inlined_call_operand.vmem [shape: f32[16,512], index: 1, kind: input, shape index: {}]
  %s2 = inlined_call_operand.hbm [shape: f32[128,512], index: 2, kind: input, shape index: {}]
  %s3 = inlined_call_operand.vmem [shape: f32[1,512], index: 3, kind: input, shape index: {}]
  %s4 = inlined_call_operand.hbm [shape: f32[128,128], index: 4, kind: input, shape index: {}]
  %s5 = inlined_call_operand.vmem [shape: f32[1,128], index: 5, kind: input, shape index: {}]
  %s6 = inlined_call_operand.hbm [shape: f32[64,128], index: 6, kind: output, shape index: {0}]
  %s7 = inlined_call_operand.hbm [shape: f32[8,128], index: 7, kind: output, shape index: {1}]
  %8 = xla_tuple %s6, %s7
  %s9 = sld [smem:[#allocation0]]
  $region81: #{tpu_custom_call.1} parent=0
    _
  %s11 = ssub.s32 1, %s9
  %s12 = scalar_select 0, %s11, %s9
  $region1: #{tpu_custom_call.1} parent=0
    #allocation5 [shape = 'u8[262144]{0}', space=vmem, size = 0x40000, scoped, tag = 'input window, operand 2, single buffered']
    #allocation6 [shape = 's32[2]{0}', space=sflag, size = 0x8, scoped, tag = 'scoped memory for tpu_custom_call.1']
    #allocation7 [shape = 's32[2]{0}', space=sflag, size = 0x8, scoped, tag = 'scoped memory for tpu_custom_call.1']
    #allocation8 [shape = 'u8[65536]{0}', space=vmem, size = 0x10000, scoped, tag = 'input window, operand 4, single buffered']
    #allocation9 [shape = 's32[1]{0}', space=sflag, size = 0x4, scoped, tag = 'scoped memory for tpu_custom_call.1']
    #allocation10 [shape = 'u8[32768]{0}', space=vmem, size = 0x8000, scoped, tag = 'output window, operand 0']
    #allocation11 [shape = 'u8[4096]{0}', space=vmem, size = 0x1000, scoped, tag = 'output window, operand 1, single buffered']
    #allocation12 [shape = 's32[1]{0}', space=sflag, size = 0x4, scoped, tag = 'scoped memory for tpu_custom_call.1']
    %13 = vsyncpa [#allocation6], 0
    %14 = vsyncpa [#allocation9], 0
    %15 = vsyncpa [#allocation7], 0
    %s16 = scalar_lea.sflag [#allocation7], 1
    %17 = vsyncpa %s16, 0
    %18 = vsyncpa [#allocation12], 0
    loop: start=0, step=1, limit=4
    $region2: #{tpu_custom_call.1} parent=1 // loop_pre_header
      _
    $region3: #{tpu_custom_call.1} parent=1 // loop_header
      %s20 = sphi 0, %s24
      %p21 = scmp.ge.s32.totalorder %s20, 4
      %s30 = sphi 0, %s32
      %s33 = sphi 0, %s30
      %s34 = sphi 0, %s33
      %s50 = sphi 0, %s34
      %s54 = sphi 0, %s54
      %s56 = sphi 0, %s54
      %s57 = sphi 0, %s56
      %s71 = sphi 0, %s57
      %s75 = sphi 0, %s75
      %s77 = sphi 0, %s75
      %s78 = sphi 0, %s77
      %s92 = sphi 0, %s78
      %s96 = sphi 0, %s96
      %s98 = sphi 0, %s96
      %s99 = sphi 0, %s98
      %s113 = sphi 0, %s99
      %s117 = sphi 0, %s117
      %s119 = sphi 0, %s117
      %s120 = sphi 0, %s119
      %s134 = sphi 0, %s120
      %s138 = sphi 0, %s138
      %s140 = sphi 0, %s138
      %s141 = sphi 0, %s140
      %s155 = sphi 0, %s141
      %s161 = sphi 0, %s163
      %s164 = sphi 0, %s161
      %s165 = sphi 0, %s164
      %s181 = sphi 0, %s165
      %s185 = sphi 0, %s185
      %s187 = sphi 0, %s185
      %s188 = sphi 0, %s187
      %s202 = sphi 0, %s188
    $region4: #{tpu_custom_call.1} parent=1 // loop_header_branch
      %23 = sbr.rel (%p21) target = $region8
    $region5: #{tpu_custom_call.1} parent=1 // loop_body
      %s25 = ssub.s32 %s20, 1
      %s26 = ssub.s32 %s20, 2
      %s27 = sadd.s32 %s20, 1
      %s28 = ssub.s32 %s20, %s27
      %p29 = scmp.eq.s32.totalorder %s28, 0
      %s31 = sadd.s32 %s30, 1
      %s32 = scalar_select %p29, %s30, %s31
      %p35 = pneg %p29
      %p36 = scmp.eq.s32.totalorder %s20, 1
      %p37 = por %p35, %p36
      %p38 = scmp.ne.s32.totalorder %s30, %s33
      %p39 = scmp.eq.s32.totalorder %s20, 0
      %p40 = por %p38, %p39
      %p41 = scmp.ne.s32.totalorder %s30, %s33
      %p42 = scmp.eq.s32.totalorder %s25, 1
      %p43 = por %p41, %p42
      %p44 = scmp.ne.s32.totalorder %s33, %s34
      %p45 = scmp.eq.s32.totalorder %s25, 0
      %p46 = por %p44, %p45
      %p47 = scmp.ne.s32.totalorder %s33, %s34
      %p48 = scmp.eq.s32.totalorder %s26, 1
      %p49 = por %p47, %p48
      %p51 = scmp.ne.s32.totalorder %s34, %s50
      %p52 = scmp.eq.s32.totalorder %s26, 0
      %p53 = por %p51, %p52
      %s55 = sadd.s32 %s54, 1
      %p58 = scmp.eq.s32.totalorder %s20, 1
      %p59 = scmp.ne.s32.totalorder %s54, %s56
      %p60 = scmp.eq.s32.totalorder %s20, 0
      %p61 = por %p59, %p60
      %p62 = scmp.ne.s32.totalorder %s54, %s56
      %p63 = scmp.eq.s32.totalorder %s25, 1
      %p64 = por %p62, %p63
      %p65 = scmp.ne.s32.totalorder %s56, %s57
      %p66 = scmp.eq.s32.totalorder %s25, 0
      %p67 = por %p65, %p66
      %p68 = scmp.ne.s32.totalorder %s56, %s57
      %p69 = scmp.eq.s32.totalorder %s26, 1
      %p70 = por %p68, %p69
      %p72 = scmp.ne.s32.totalorder %s57, %s71
      %p73 = scmp.eq.s32.totalorder %s26, 0
      %p74 = por %p72, %p73
      %s76 = sadd.s32 %s75, 1
      %p79 = scmp.eq.s32.totalorder %s20, 1
      %p80 = scmp.ne.s32.totalorder %s75, %s77
      %p81 = scmp.eq.s32.totalorder %s20, 0
      %p82 = por %p80, %p81
      %p83 = scmp.ne.s32.totalorder %s75, %s77
      %p84 = scmp.eq.s32.totalorder %s25, 1
      %p85 = por %p83, %p84
      %p86 = scmp.ne.s32.totalorder %s77, %s78
      %p87 = scmp.eq.s32.totalorder %s25, 0
      %p88 = por %p86, %p87
      %p89 = scmp.ne.s32.totalorder %s77, %s78
      %p90 = scmp.eq.s32.totalorder %s26, 1
      %p91 = por %p89, %p90
      %p93 = scmp.ne.s32.totalorder %s78, %s92
      %p94 = scmp.eq.s32.totalorder %s26, 0
      %p95 = por %p93, %p94
      %s97 = sadd.s32 %s96, 1
      %p100 = scmp.eq.s32.totalorder %s20, 1
      %p101 = scmp.ne.s32.totalorder %s96, %s98
      %p102 = scmp.eq.s32.totalorder %s20, 0
      %p103 = por %p101, %p102
      %p104 = scmp.ne.s32.totalorder %s96, %s98
      %p105 = scmp.eq.s32.totalorder %s25, 1
      %p106 = por %p104, %p105
      %p107 = scmp.ne.s32.totalorder %s98, %s99
      %p108 = scmp.eq.s32.totalorder %s25, 0
      %p109 = por %p107, %p108
      %p110 = scmp.ne.s32.totalorder %s98, %s99
      %p111 = scmp.eq.s32.totalorder %s26, 1
      %p112 = por %p110, %p111
      %p114 = scmp.ne.s32.totalorder %s99, %s113
      %p115 = scmp.eq.s32.totalorder %s26, 0
      %p116 = por %p114, %p115
      %s118 = sadd.s32 %s117, 1
      %p121 = scmp.eq.s32.totalorder %s20, 1
      %p122 = scmp.ne.s32.totalorder %s117, %s119
      %p123 = scmp.eq.s32.totalorder %s20, 0
      %p124 = por %p122, %p123
      %p125 = scmp.ne.s32.totalorder %s117, %s119
      %p126 = scmp.eq.s32.totalorder %s25, 1
      %p127 = por %p125, %p126
      %p128 = scmp.ne.s32.totalorder %s119, %s120
      %p129 = scmp.eq.s32.totalorder %s25, 0
      %p130 = por %p128, %p129
      %p131 = scmp.ne.s32.totalorder %s119, %s120
      %p132 = scmp.eq.s32.totalorder %s26, 1
      %p133 = por %p131, %p132
      %p135 = scmp.ne.s32.totalorder %s120, %s134
      %p136 = scmp.eq.s32.totalorder %s26, 0
      %p137 = por %p135, %p136
      %s139 = sadd.s32 %s138, 1
      %p142 = scmp.eq.s32.totalorder %s20, 1
      %p143 = scmp.ne.s32.totalorder %s138, %s140
      %p144 = scmp.eq.s32.totalorder %s20, 0
      %p145 = por %p143, %p144
      %p146 = scmp.ne.s32.totalorder %s138, %s140
      %p147 = scmp.eq.s32.totalorder %s25, 1
      %p148 = por %p146, %p147
      %p149 = scmp.ne.s32.totalorder %s140, %s141
      %p150 = scmp.eq.s32.totalorder %s25, 0
      %p151 = por %p149, %p150
      %p152 = scmp.ne.s32.totalorder %s140, %s141
      %p153 = scmp.eq.s32.totalorder %s26, 1
      %p154 = por %p152, %p153
      %p156 = scmp.ne.s32.totalorder %s141, %s155
      %p157 = scmp.eq.s32.totalorder %s26, 0
      %p158 = por %p156, %p157
      %s159 = ssub.s32 %s20, %s27
      %p160 = scmp.eq.s32.totalorder %s159, 0
      %s162 = sadd.s32 %s161, 1
      %s163 = scalar_select %p160, %s161, %s162
      %p166 = pneg %p160
      %p167 = scmp.eq.s32.totalorder %s20, 1
      %p168 = por %p166, %p167
      %p169 = scmp.ne.s32.totalorder %s161, %s164
      %p170 = scmp.eq.s32.totalorder %s20, 0
      %p171 = por %p169, %p170
      %p172 = scmp.ne.s32.totalorder %s161, %s164
      %p173 = scmp.eq.s32.totalorder %s25, 1
      %p174 = por %p172, %p173
      %p175 = scmp.ne.s32.totalorder %s164, %s165
      %p176 = scmp.eq.s32.totalorder %s25, 0
      %p177 = por %p175, %p176
      %p178 = scmp.ne.s32.totalorder %s164, %s165
      %p179 = scmp.eq.s32.totalorder %s26, 1
      %p180 = por %p178, %p179
      %p182 = scmp.ne.s32.totalorder %s165, %s181
      %p183 = scmp.eq.s32.totalorder %s26, 0
      %p184 = por %p182, %p183
      %s186 = sadd.s32 %s185, 1
      %p189 = scmp.eq.s32.totalorder %s20, 1
      %p190 = scmp.ne.s32.totalorder %s185, %s187
      %p191 = scmp.eq.s32.totalorder %s20, 0
      %p192 = por %p190, %p191
      %p193 = scmp.ne.s32.totalorder %s185, %s187
      %p194 = scmp.eq.s32.totalorder %s25, 1
      %p195 = por %p193, %p194
      %p196 = scmp.ne.s32.totalorder %s187, %s188
      %p197 = scmp.eq.s32.totalorder %s25, 0
      %p198 = por %p196, %p197
      %p199 = scmp.ne.s32.totalorder %s187, %s188
      %p200 = scmp.eq.s32.totalorder %s26, 1
      %p201 = por %p199, %p200
      %p203 = scmp.ne.s32.totalorder %s188, %s202
      %p204 = scmp.eq.s32.totalorder %s26, 0
      %p205 = por %p203, %p204
      %p206 = scmp.le.s32.totalorder 1, %s20
      %p207 = scmp.lt.s32.totalorder %s20, 3
      %p208 = pnand %p206, %p207
      %p209 = pneg %p208
      // Predicated region
      $region9: #{tpu_custom_call.1} parent=5 // pred_check
        _
      $region10: #{tpu_custom_call.1} parent=5 // pred_check_branch
        %211 = sbr.rel (%p208) target = $region12
      $region11: #{tpu_custom_call.1} parent=5 // pred_region
        %s212 = ssub.s32 %s20, 1
        // Predicated region
        $region13: #{tpu_custom_call.1} parent=11 // pred_check
          %p213 = pneg %p67
        $region14: #{tpu_custom_call.1} parent=11 // pred_check_branch
          %215 = sbr.rel (%p213) target = $region16
        $region15: #{tpu_custom_call.1} parent=11 // pred_region
          _
        $region16: #{tpu_custom_call.1} parent=11 // pred_fallthru
          _
        // Predicated region
        $region17: #{tpu_custom_call.1} parent=11 // pred_check
          %p216 = pneg %p88
        $region18: #{tpu_custom_call.1} parent=11 // pred_check_branch
          %218 = sbr.rel (%p216) target = $region20
        $region19: #{tpu_custom_call.1} parent=11 // pred_region
          %220 = vsyncadd [#allocation6], 0
          %s221 = sshll.u32 %s2, 4
          %s222 = int_to_ptr.hbm [resolvable:$true] %s221
          %s223 = sshll.u32 [#allocation5], 4
          %s224 = int_to_ptr.vmem [resolvable:$true] %s223
          %229 = dma.hbm_to_vmem [thread:$0]  %s222, 8192, %s224, [#allocation6], 512, 512, 32
        $region20: #{tpu_custom_call.1} parent=11 // pred_fallthru
          _
        // Predicated region
        $region21: #{tpu_custom_call.1} parent=11 // pred_check
          %p230 = pneg %p109
        $region22: #{tpu_custom_call.1} parent=11 // pred_check_branch
          %232 = sbr.rel (%p230) target = $region24
        $region23: #{tpu_custom_call.1} parent=11 // pred_region
          _
        $region24: #{tpu_custom_call.1} parent=11 // pred_fallthru
          _
        // Predicated region
        $region25: #{tpu_custom_call.1} parent=11 // pred_check
          %p233 = pneg %p130
        $region26: #{tpu_custom_call.1} parent=11 // pred_check_branch
          %235 = sbr.rel (%p233) target = $region28
        $region27: #{tpu_custom_call.1} parent=11 // pred_region
          %237 = vsyncadd [#allocation9], 0
          %s238 = sshll.u32 %s4, 4
          %s239 = int_to_ptr.hbm [resolvable:$true] %s238
          %s240 = sshll.u32 [#allocation8], 4
          %s241 = int_to_ptr.vmem [resolvable:$true] %s240
          %246 = dma.hbm_to_vmem [thread:$0]  %s239, 2048, %s241, [#allocation9], 128, 128, 8
        $region28: #{tpu_custom_call.1} parent=11 // pred_fallthru
          _
        // Predicated region
        $region29: #{tpu_custom_call.1} parent=11 // pred_check
          %p247 = pneg %p151
        $region30: #{tpu_custom_call.1} parent=11 // pred_check_branch
          %249 = sbr.rel (%p247) target = $region32
        $region31: #{tpu_custom_call.1} parent=11 // pred_region
          _
        $region32: #{tpu_custom_call.1} parent=11 // pred_fallthru
          _
      $region12: #{tpu_custom_call.1} parent=5 // pred_fallthru
        _
      %p250 = scmp.lt.s32.totalorder %s20, 2
      // Predicated region
      $region33: #{tpu_custom_call.1} parent=5 // pred_check
        %p251 = pneg %p250
      $region34: #{tpu_custom_call.1} parent=5 // pred_check_branch
        %253 = sbr.rel (%p251) target = $region36
      $region35: #{tpu_custom_call.1} parent=5 // pred_region
        // Predicated region
        $region37: #{tpu_custom_call.1} parent=35 // pred_check
          %p254 = pneg %p40
        $region38: #{tpu_custom_call.1} parent=35 // pred_check_branch
          %256 = sbr.rel (%p254) target = $region40
        $region39: #{tpu_custom_call.1} parent=35 // pred_region
          %s257 = smul.u32 4, %s20
          %p258 = scmp.lt.s32.totalorder %s257, 7
          %s259 = scalar_select %p258, %s257, 7
          %s260 = smul.addr %s259, 8
          %s261 = scalar_lea.vmem %s0, %s260
          %s262 = smul.u32 4, %s20
        $region40: #{tpu_custom_call.1} parent=35 // pred_fallthru
          _
      $region36: #{tpu_custom_call.1} parent=5 // pred_fallthru
        _
      %p263 = scmp.le.s32.totalorder 1, %s20
      %p264 = scmp.lt.s32.totalorder %s20, 3
      %p265 = pnand %p263, %p264
      %p266 = pneg %p265
      // Predicated region
      $region41: #{tpu_custom_call.1} parent=5 // pred_check
        _
      $region42: #{tpu_custom_call.1} parent=5 // pred_check_branch
        %268 = sbr.rel (%p265) target = $region44
      $region43: #{tpu_custom_call.1} parent=5 // pred_region
        %s269 = ssub.s32 %s20, 1
        // Predicated region
        $region45: #{tpu_custom_call.1} parent=43 // pred_check
          %p270 = pneg %p88
        $region46: #{tpu_custom_call.1} parent=43 // pred_check_branch
          %272 = sbr.rel (%p270) target = $region48
        $region47: #{tpu_custom_call.1} parent=43 // pred_region
          %274 = dma.done [#allocation6], 8192
        $region48: #{tpu_custom_call.1} parent=43 // pred_fallthru
          _
        // Predicated region
        $region49: #{tpu_custom_call.1} parent=43 // pred_check
          %p275 = pneg %p130
        $region50: #{tpu_custom_call.1} parent=43 // pred_check_branch
          %277 = sbr.rel (%p275) target = $region52
        $region51: #{tpu_custom_call.1} parent=43 // pred_region
          %279 = dma.done [#allocation9], 2048
        $region52: #{tpu_custom_call.1} parent=43 // pred_fallthru
          _
        %s280 = smul.u32 4, %s25
        %p281 = scmp.lt.s32.totalorder %s280, 7
        %s282 = scalar_select %p281, %s280, 7
        %s283 = smul.addr %s282, 8
        %s284 = scalar_lea.vmem %s0, %s283
        %p285 = pneg %p46
        %p286 = pneg %p43
        %p287 = pneg %p67
        %p288 = pneg %p64
        %p289 = pneg %p88
        %p290 = pneg %p85
        %p291 = pneg %p109
        %p292 = pneg %p106
        %p293 = pneg %p130
        %p294 = pneg %p127
        %p295 = pneg %p151
        %p296 = pneg %p148
        %p297 = pneg %p177
        %p298 = pneg %p174
        %s299 = sand.u32 %s164, 1
        %s300 = scalar_lea.sflag [#allocation7], %s299
        %s301 = sand.u32 %s164, 1
        %s302 = smul.addr %s301, 32
        %s303 = scalar_lea.vmem [#allocation10], %s302
        %p304 = pneg %p198
        %p305 = pneg %p195
        %s306 = smul.u32 4, %s25
        %p307 = scmp.lt.s32.totalorder %s306, 7
        %s308 = scalar_select %p307, %s306, 7
        %s309 = smul.addr %s308, 8
        %s310 = scalar_lea.vmem %s0, %s309
        %s311 = smul.u32 4, %s25
        %s312 = smul.u32 4, %s25
        %p313 = scmp.eq.s32.totalorder %s25, 0
        // Predicated region
        $region53: #{tpu_custom_call.1} parent=43 // pred_check
          %p314 = pneg %p313
        $region54: #{tpu_custom_call.1} parent=43 // pred_check_branch
          %316 = sbr.rel (%p314) target = $region56
        $region55: #{tpu_custom_call.1} parent=43 // pred_region
          %317 = vst [vmem:[#allocation3] sm:$0xff] 0.0
          %318 = vst [vmem:[#allocation4] sm:$0xff] 0.0
        $region56: #{tpu_custom_call.1} parent=43 // pred_fallthru
          _
        %v319 = vld [vmem:[%s310] sm:$0xff]
        %v320 = vld [vmem:[%s310 + $0x8] sm:$0xff]
        %v321 = vld [vmem:[%s310 + $0x10] sm:$0xff]
        %v322 = vld [vmem:[%s310 + $0x18] sm:$0xff]
        %v323 = vld [vmem:[%s1] sm:$0xff]
        %v324 = vld [vmem:[%s1 + $0x8] sm:$0xff]
        %v325 = vld [vmem:[%s1 + $0x10] sm:$0xff]
        %v326 = vld [vmem:[%s1 + $0x18] sm:$0xff]
        %v327 = vld [vmem:[%s1 + $0x20] sm:$0xff]
        %v328 = vld [vmem:[%s1 + $0x28] sm:$0xff]
        %v329 = vld [vmem:[%s1 + $0x30] sm:$0xff]
        %v330 = vld [vmem:[%s1 + $0x38] sm:$0xff]
        %v331 = vld [vmem:[%s3] sm:$0xf]
        %v333 = vperm.slane %v331, 0
        %v334 = vperm.slane %v331, 1
        %v335 = vperm.slane %v331, 2
        %v336 = vperm.slane %v331, 3
        %vm341 = vcmask 130048
        %v343 = vsel %vm341, %v319, 0
        %v346 = vsel %vm341, %v320, 0
        %v349 = vsel %vm341, %v321, 0
        %v352 = vsel %vm341, %v322, 0
        %354 = vmatpush.msra.mxu0 0.0
        %355 = vmatpush.msra.mxu0 0.0
        %356 = vmatpush.msra.mxu0 0.0
        %357 = vmatpush.msra.mxu0 0.0
        %358 = vmatpush.msra.mxu0 0.0
        %359 = vmatpush.msra.mxu0 0.0
        %360 = vmatpush.msra.mxu0 0.0
        %361 = vmatpush.msra.mxu0 0.0
        %362 = vmatpush.msra.mxu0 0.0
        %363 = vmatpush.msra.mxu0 0.0
        %364 = vmatpush.msra.mxu0 0.0
        %365 = vmatpush.msra.mxu0 0.0
        %366 = vmatpush.msra.mxu0 0.0
        %367 = vmatpush.msra.mxu0 0.0
        %368 = vmatpush.msra.mxu0 %v327
        %369 = vmatpush.msra.mxu0 %v323
        %370 = vmatmul.f32.gmra.mxu0 %v343
        %v371 = vpop.f32.mrf.mxu0
        %v372 = vadd.f32 %v333, %v371
        %373 = vmatmul.f32.gmra.mxu0 %v346
        %v374 = vpop.f32.mrf.mxu0
        %v375 = vadd.f32 %v333, %v374
        %376 = vmatmul.f32.gmra.mxu0 %v349
        %v377 = vpop.f32.mrf.mxu0
        %v378 = vadd.f32 %v333, %v377
        %379 = vmatmul.f32.gmra.mxu0 %v352
        %v380 = vpop.f32.mrf.mxu0
        %v381 = vadd.f32 %v333, %v380
        %382 = vdwg.mxu0
        %383 = vmatpush.msra.mxu0 0.0
        %384 = vmatpush.msra.mxu0 0.0
        %385 = vmatpush.msra.mxu0 0.0
        %386 = vmatpush.msra.mxu0 0.0
        %387 = vmatpush.msra.mxu0 0.0
        %388 = vmatpush.msra.mxu0 0.0
        %389 = vmatpush.msra.mxu0 0.0
        %390 = vmatpush.msra.mxu0 0.0
        %391 = vmatpush.msra.mxu0 0.0
        %392 = vmatpush.msra.mxu0 0.0
        %393 = vmatpush.msra.mxu0 0.0
        %394 = vmatpush.msra.mxu0 0.0
        %395 = vmatpush.msra.mxu0 0.0
        %396 = vmatpush.msra.mxu0 0.0
        %397 = vmatpush.msra.mxu0 %v328
        %398 = vmatpush.msra.mxu0 %v324
        %399 = vmatmul.f32.gmra.mxu0 %v343
        %v400 = vpop.f32.mrf.mxu0
        %v401 = vadd.f32 %v334, %v400
        %402 = vmatmul.f32.gmra.mxu0 %v346
        %v403 = vpop.f32.mrf.mxu0
        %v404 = vadd.f32 %v334, %v403
        %405 = vmatmul.f32.gmra.mxu0 %v349
        %v406 = vpop.f32.mrf.mxu0
        %v407 = vadd.f32 %v334, %v406
        %408 = vmatmul.f32.gmra.mxu0 %v352
        %v409 = vpop.f32.mrf.mxu0
        %v410 = vadd.f32 %v334, %v409
        %411 = vdwg.mxu0
        %412 = vmatpush.msra.mxu0 0.0
        %413 = vmatpush.msra.mxu0 0.0
        %414 = vmatpush.msra.mxu0 0.0
        %415 = vmatpush.msra.mxu0 0.0
        %416 = vmatpush.msra.mxu0 0.0
        %417 = vmatpush.msra.mxu0 0.0
        %418 = vmatpush.msra.mxu0 0.0
        %419 = vmatpush.msra.mxu0 0.0
        %420 = vmatpush.msra.mxu0 0.0
        %421 = vmatpush.msra.mxu0 0.0
        %422 = vmatpush.msra.mxu0 0.0
        %423 = vmatpush.msra.mxu0 0.0
        %424 = vmatpush.msra.mxu0 0.0
        %425 = vmatpush.msra.mxu0 0.0
        %426 = vmatpush.msra.mxu0 %v329
        %427 = vmatpush.msra.mxu0 %v325
        %428 = vmatmul.f32.gmra.mxu0 %v343
        %v429 = vpop.f32.mrf.mxu0
        %v430 = vadd.f32 %v335, %v429
        %431 = vmatmul.f32.gmra.mxu0 %v346
        %v432 = vpop.f32.mrf.mxu0
        %v433 = vadd.f32 %v335, %v432
        %434 = vmatmul.f32.gmra.mxu0 %v349
        %v435 = vpop.f32.mrf.mxu0
        %v436 = vadd.f32 %v335, %v435
        %437 = vmatmul.f32.gmra.mxu0 %v352
        %v438 = vpop.f32.mrf.mxu0
        %v439 = vadd.f32 %v335, %v438
        %440 = vdwg.mxu0
        %441 = vmatpush.msra.mxu0 0.0
        %442 = vmatpush.msra.mxu0 0.0
        %443 = vmatpush.msra.mxu0 0.0
        %444 = vmatpush.msra.mxu0 0.0
        %445 = vmatpush.msra.mxu0 0.0
        %446 = vmatpush.msra.mxu0 0.0
        %447 = vmatpush.msra.mxu0 0.0
        %448 = vmatpush.msra.mxu0 0.0
        %449 = vmatpush.msra.mxu0 0.0
        %450 = vmatpush.msra.mxu0 0.0
        %451 = vmatpush.msra.mxu0 0.0
        %452 = vmatpush.msra.mxu0 0.0
        %453 = vmatpush.msra.mxu0 0.0
        %454 = vmatpush.msra.mxu0 0.0
        %455 = vmatpush.msra.mxu0 %v330
        %456 = vmatpush.msra.mxu0 %v326
        %457 = vmatmul.f32.gmra.mxu0 %v343
        %v458 = vpop.f32.mrf.mxu0
        %v459 = vadd.f32 %v336, %v458
        %460 = vmatmul.f32.gmra.mxu0 %v346
        %v461 = vpop.f32.mrf.mxu0
        %v462 = vadd.f32 %v336, %v461
        %463 = vmatmul.f32.gmra.mxu0 %v349
        %v464 = vpop.f32.mrf.mxu0
        %v465 = vadd.f32 %v336, %v464
        %466 = vmatmul.f32.gmra.mxu0 %v352
        %v467 = vpop.f32.mrf.mxu0
        %v468 = vadd.f32 %v336, %v467
        %469 = vdwg.mxu0
        %470 = vst [vmem:[#allocation2] sm:$0xff] %v372
        %471 = vst [vmem:[#allocation2 + $0x8] sm:$0xff] %v401
        %472 = vst [vmem:[#allocation2 + $0x10] sm:$0xff] %v430
        %473 = vst [vmem:[#allocation2 + $0x18] sm:$0xff] %v459
        %474 = vst [vmem:[#allocation2 + $0x20] sm:$0xff] %v375
        %475 = vst [vmem:[#allocation2 + $0x28] sm:$0xff] %v404
        %476 = vst [vmem:[#allocation2 + $0x30] sm:$0xff] %v433
        %477 = vst [vmem:[#allocation2 + $0x38] sm:$0xff] %v462
        %478 = vst [vmem:[#allocation2 + $0x40] sm:$0xff] %v378
        %479 = vst [vmem:[#allocation2 + $0x48] sm:$0xff] %v407
        %480 = vst [vmem:[#allocation2 + $0x50] sm:$0xff] %v436
        %481 = vst [vmem:[#allocation2 + $0x58] sm:$0xff] %v465
        %482 = vst [vmem:[#allocation2 + $0x60] sm:$0xff] %v381
        %483 = vst [vmem:[#allocation2 + $0x68] sm:$0xff] %v410
        %484 = vst [vmem:[#allocation2 + $0x70] sm:$0xff] %v439
        %485 = vst [vmem:[#allocation2 + $0x78] sm:$0xff] %v468
        %v486 = vld [vmem:[#allocation3] sm:$0xff]
        %v487 = vld [vmem:[#allocation4] sm:$0xff]
        %s488 = smul.u32 0, 4
        %s489 = smul.addr %s488, 8
        %s490 = scalar_lea.vmem [#allocation2], %s489
        %v491 = vld [vmem:[%s490] sm:$0xff]
        %v492 = vld [vmem:[%s490 + $0x8] sm:$0xff]
        %v493 = vld [vmem:[%s490 + $0x10] sm:$0xff]
        %v494 = vld [vmem:[%s490 + $0x18] sm:$0xff]
        %v495 = vld [vmem:[#allocation5] sm:$0xff]
        %v496 = vld [vmem:[#allocation5 + $0x8] sm:$0xff]
        %v497 = vld [vmem:[#allocation5 + $0x10] sm:$0xff]
        %v498 = vld [vmem:[#allocation5 + $0x18] sm:$0xff]
        %v499 = vld [vmem:[#allocation5 + $0x20] sm:$0xff]
        %v500 = vld [vmem:[#allocation5 + $0x28] sm:$0xff]
        %v501 = vld [vmem:[#allocation5 + $0x30] sm:$0xff]
        %v502 = vld [vmem:[#allocation5 + $0x38] sm:$0xff]
        %v503 = vld [vmem:[#allocation5 + $0x40] sm:$0xff]
        %v504 = vld [vmem:[#allocation5 + $0x48] sm:$0xff]
        %v505 = vld [vmem:[#allocation5 + $0x50] sm:$0xff]
        %v506 = vld [vmem:[#allocation5 + $0x58] sm:$0xff]
        %v507 = vld [vmem:[#allocation5 + $0x60] sm:$0xff]
        %v508 = vld [vmem:[#allocation5 + $0x68] sm:$0xff]
        %v509 = vld [vmem:[#allocation5 + $0x70] sm:$0xff]
        %v510 = vld [vmem:[#allocation5 + $0x78] sm:$0xff]
        %v511 = vld [vmem:[#allocation5 + $0x80] sm:$0xff]
        %v512 = vld [vmem:[#allocation5 + $0x88] sm:$0xff]
        %v513 = vld [vmem:[#allocation5 + $0x90] sm:$0xff]
        %v514 = vld [vmem:[#allocation5 + $0x98] sm:$0xff]
        %v515 = vld [vmem:[#allocation5 + $0xa0] sm:$0xff]
        %v516 = vld [vmem:[#allocation5 + $0xa8] sm:$0xff]
        %v517 = vld [vmem:[#allocation5 + $0xb0] sm:$0xff]
        %v518 = vld [vmem:[#allocation5 + $0xb8] sm:$0xff]
        %v519 = vld [vmem:[#allocation5 + $0xc0] sm:$0xff]
        %v520 = vld [vmem:[#allocation5 + $0xc8] sm:$0xff]
        %v521 = vld [vmem:[#allocation5 + $0xd0] sm:$0xff]
        %v522 = vld [vmem:[#allocation5 + $0xd8] sm:$0xff]
        %v523 = vld [vmem:[#allocation5 + $0xe0] sm:$0xff]
        %v524 = vld [vmem:[#allocation5 + $0xe8] sm:$0xff]
        %v525 = vld [vmem:[#allocation5 + $0xf0] sm:$0xff]
        %v526 = vld [vmem:[#allocation5 + $0xf8] sm:$0xff]
        %v527 = vld [vmem:[#allocation5 + $0x100] sm:$0xff]
        %v528 = vld [vmem:[#allocation5 + $0x108] sm:$0xff]
        %v529 = vld [vmem:[#allocation5 + $0x110] sm:$0xff]
        %v530 = vld [vmem:[#allocation5 + $0x118] sm:$0xff]
        %v531 = vld [vmem:[#allocation5 + $0x120] sm:$0xff]
        %v532 = vld [vmem:[#allocation5 + $0x128] sm:$0xff]
        %v533 = vld [vmem:[#allocation5 + $0x130] sm:$0xff]
        %v534 = vld [vmem:[#allocation5 + $0x138] sm:$0xff]
        %v535 = vld [vmem:[#allocation5 + $0x140] sm:$0xff]
        %v536 = vld [vmem:[#allocation5 + $0x148] sm:$0xff]
        %v537 = vld [vmem:[#allocation5 + $0x150] sm:$0xff]
        %v538 = vld [vmem:[#allocation5 + $0x158] sm:$0xff]
        %v539 = vld [vmem:[#allocation5 + $0x160] sm:$0xff]
        %v540 = vld [vmem:[#allocation5 + $0x168] sm:$0xff]
        %v541 = vld [vmem:[#allocation5 + $0x170] sm:$0xff]
        %v542 = vld [vmem:[#allocation5 + $0x178] sm:$0xff]
        %v543 = vld [vmem:[#allocation5 + $0x180] sm:$0xff]
        %v544 = vld [vmem:[#allocation5 + $0x188] sm:$0xff]
        %v545 = vld [vmem:[#allocation5 + $0x190] sm:$0xff]
        %v546 = vld [vmem:[#allocation5 + $0x198] sm:$0xff]
        %v547 = vld [vmem:[#allocation5 + $0x1a0] sm:$0xff]
        %v548 = vld [vmem:[#allocation5 + $0x1a8] sm:$0xff]
        %v549 = vld [vmem:[#allocation5 + $0x1b0] sm:$0xff]
        %v550 = vld [vmem:[#allocation5 + $0x1b8] sm:$0xff]
        %v551 = vld [vmem:[#allocation5 + $0x1c0] sm:$0xff]
        %v552 = vld [vmem:[#allocation5 + $0x1c8] sm:$0xff]
        %v553 = vld [vmem:[#allocation5 + $0x1d0] sm:$0xff]
        %v554 = vld [vmem:[#allocation5 + $0x1d8] sm:$0xff]
        %v555 = vld [vmem:[#allocation5 + $0x1e0] sm:$0xff]
        %v556 = vld [vmem:[#allocation5 + $0x1e8] sm:$0xff]
        %v557 = vld [vmem:[#allocation5 + $0x1f0] sm:$0xff]
        %v558 = vld [vmem:[#allocation5 + $0x1f8] sm:$0xff]
        %559 = vmatpush.msra.mxu0 %v555
        %560 = vmatpush.msra.mxu0 %v551
        %561 = vmatpush.msra.mxu0 %v547
        %562 = vmatpush.msra.mxu0 %v543
        %563 = vmatpush.msra.mxu0 %v539
        %564 = vmatpush.msra.mxu0 %v535
        %565 = vmatpush.msra.mxu0 %v531
        %566 = vmatpush.msra.mxu0 %v527
        %567 = vmatpush.msra.mxu0 %v523
        %568 = vmatpush.msra.mxu0 %v519
        %569 = vmatpush.msra.mxu0 %v515
        %570 = vmatpush.msra.mxu0 %v511
        %571 = vmatpush.msra.mxu0 %v507
        %572 = vmatpush.msra.mxu0 %v503
        %573 = vmatpush.msra.mxu0 %v499
        %574 = vmatpush.msra.mxu0 %v495
        %575 = vmatmul.f32.gmra.mxu0 %v486
        %v576 = vpop.f32.mrf.mxu0
        %v577 = vadd.f32 0.0, %v576
        %578 = vdwg.mxu0
        %579 = vmatpush.msra.mxu0 %v556
        %580 = vmatpush.msra.mxu0 %v552
        %581 = vmatpush.msra.mxu0 %v548
        %582 = vmatpush.msra.mxu0 %v544
        %583 = vmatpush.msra.mxu0 %v540
        %584 = vmatpush.msra.mxu0 %v536
        %585 = vmatpush.msra.mxu0 %v532
        %586 = vmatpush.msra.mxu0 %v528
        %587 = vmatpush.msra.mxu0 %v524
        %588 = vmatpush.msra.mxu0 %v520
        %589 = vmatpush.msra.mxu0 %v516
        %590 = vmatpush.msra.mxu0 %v512
        %591 = vmatpush.msra.mxu0 %v508
        %592 = vmatpush.msra.mxu0 %v504
        %593 = vmatpush.msra.mxu0 %v500
        %594 = vmatpush.msra.mxu0 %v496
        %595 = vmatmul.f32.gmra.mxu0 %v486
        %v596 = vpop.f32.mrf.mxu0
        %v597 = vadd.f32 0.0, %v596
        %598 = vdwg.mxu0
        %599 = vmatpush.msra.mxu0 %v557
        %600 = vmatpush.msra.mxu0 %v553
        %601 = vmatpush.msra.mxu0 %v549
        %602 = vmatpush.msra.mxu0 %v545
        %603 = vmatpush.msra.mxu0 %v541
        %604 = vmatpush.msra.mxu0 %v537
        %605 = vmatpush.msra.mxu0 %v533
        %606 = vmatpush.msra.mxu0 %v529
        %607 = vmatpush.msra.mxu0 %v525
        %608 = vmatpush.msra.mxu0 %v521
        %609 = vmatpush.msra.mxu0 %v517
        %610 = vmatpush.msra.mxu0 %v513
        %611 = vmatpush.msra.mxu0 %v509
        %612 = vmatpush.msra.mxu0 %v505
        %613 = vmatpush.msra.mxu0 %v501
        %614 = vmatpush.msra.mxu0 %v497
        %615 = vmatmul.f32.gmra.mxu0 %v486
        %v616 = vpop.f32.mrf.mxu0
        %v617 = vadd.f32 0.0, %v616
        %618 = vdwg.mxu0
        %619 = vmatpush.msra.mxu0 %v558
        %620 = vmatpush.msra.mxu0 %v554
        %621 = vmatpush.msra.mxu0 %v550
        %622 = vmatpush.msra.mxu0 %v546
        %623 = vmatpush.msra.mxu0 %v542
        %624 = vmatpush.msra.mxu0 %v538
        %625 = vmatpush.msra.mxu0 %v534
        %626 = vmatpush.msra.mxu0 %v530
        %627 = vmatpush.msra.mxu0 %v526
        %628 = vmatpush.msra.mxu0 %v522
        %629 = vmatpush.msra.mxu0 %v518
        %630 = vmatpush.msra.mxu0 %v514
        %631 = vmatpush.msra.mxu0 %v510
        %632 = vmatpush.msra.mxu0 %v506
        %633 = vmatpush.msra.mxu0 %v502
        %634 = vmatpush.msra.mxu0 %v498
        %635 = vmatmul.f32.gmra.mxu0 %v486
        %v636 = vpop.f32.mrf.mxu0
        %v637 = vadd.f32 0.0, %v636
        %638 = vdwg.mxu0
        %v639 = vadd.f32 %v491, %v577
        %v640 = vadd.f32 %v492, %v597
        %v641 = vadd.f32 %v493, %v617
        %v642 = vadd.f32 %v494, %v637
        %v643 = vxor.u32 %v639, 2147483648
        %v644 = vxor.u32 %v640, 2147483648
        %v645 = vxor.u32 %v641, 2147483648
        %v646 = vmul.f32 %v643, 1.442695
        %v647 = vpow.pop %v646
        %v648 = vmul.f32 %v644, 1.442695
        %v649 = vpow.pop %v648
        %v650 = vmul.f32 %v645, 1.442695
        %v651 = vpow.pop %v650
        %v652 = vadd.f32 %v647, 1.0
        %v653 = vadd.f32 %v649, 1.0
        %v654 = vadd.f32 %v651, 1.0
        %v655 = vrcp.pop %v652
        %v656 = vmul.f32 %v652, %v655
        %v657 = vsub.f32 1.0, %v656
        %v658 = vmul.f32 %v655, %v657
        %v659 = vadd.f32 %v655, %v658
        %vm660 = vweird.f32 %v652
        %vm661 = vweird.f32 %v655
        %vm662 = vmor %vm660, %vm661
        %v663 = vsel %vm662, %v655, %v659
        %v664 = vand.u32 2147483647, %v652
        %vm665 = vcmp.eq.f32.partialorder %v664, 8.507059e+37
        %v666 = vand.u32 %v652, 2147483648
        %v667 = vor.u32 1.1754944e-38, %v666
        %v668 = vsel %vm665, %v667, %v663
        %v669 = vmul.f32 1.0, %v668
        %v670 = vrcp.pop %v653
        %v671 = vmul.f32 %v653, %v670
        %v672 = vsub.f32 1.0, %v671
        %v673 = vmul.f32 %v670, %v672
        %v674 = vadd.f32 %v670, %v673
        %vm675 = vweird.f32 %v653
        %vm676 = vweird.f32 %v670
        %vm677 = vmor %vm675, %vm676
        %v678 = vsel %vm677, %v670, %v674
        %v679 = vand.u32 2147483647, %v653
        %vm680 = vcmp.eq.f32.partialorder %v679, 8.507059e+37
        %v681 = vand.u32 %v653, 2147483648
        %v682 = vor.u32 1.1754944e-38, %v681
        %v683 = vsel %vm680, %v682, %v678
        %v684 = vmul.f32 1.0, %v683
        %v685 = vrcp.pop %v654
        %v686 = vmul.f32 %v654, %v685
        %v687 = vsub.f32 1.0, %v686
        %v688 = vmul.f32 %v685, %v687
        %v689 = vadd.f32 %v685, %v688
        %vm690 = vweird.f32 %v654
        %vm691 = vweird.f32 %v685
        %vm692 = vmor %vm690, %vm691
        %v693 = vsel %vm692, %v685, %v689
        %v694 = vand.u32 2147483647, %v654
        %vm695 = vcmp.eq.f32.partialorder %v694, 8.507059e+37
        %v696 = vand.u32 %v654, 2147483648
        %v697 = vor.u32 1.1754944e-38, %v696
        %v698 = vsel %vm695, %v697, %v693
        %v699 = vmul.f32 1.0, %v698
        %v700 = vtanh.pop %v642
        %v701 = vmul.f32 %v684, %v487
        %v702 = vmul.f32 %v669, %v700
        %v703 = vadd.f32 %v701, %v702
        %v704 = vtanh.pop %v703
        %v705 = vmul.f32 %v699, %v704
        %706 = vst [vmem:[%s303] sm:$0xff] %v705
        %s707 = smul.u32 1, 4
        %s708 = smul.addr %s707, 8
        %s709 = scalar_lea.vmem [#allocation2], %s708
        %v710 = vld [vmem:[%s709] sm:$0xff]
        %v711 = vld [vmem:[%s709 + $0x8] sm:$0xff]
        %v712 = vld [vmem:[%s709 + $0x10] sm:$0xff]
        %v713 = vld [vmem:[%s709 + $0x18] sm:$0xff]
        %v714 = vld [vmem:[#allocation5] sm:$0xff]
        %v715 = vld [vmem:[#allocation5 + $0x8] sm:$0xff]
        %v716 = vld [vmem:[#allocation5 + $0x10] sm:$0xff]
        %v717 = vld [vmem:[#allocation5 + $0x18] sm:$0xff]
        %v718 = vld [vmem:[#allocation5 + $0x20] sm:$0xff]
        %v719 = vld [vmem:[#allocation5 + $0x28] sm:$0xff]
        %v720 = vld [vmem:[#allocation5 + $0x30] sm:$0xff]
        %v721 = vld [vmem:[#allocation5 + $0x38] sm:$0xff]
        %v722 = vld [vmem:[#allocation5 + $0x40] sm:$0xff]
        %v723 = vld [vmem:[#allocation5 + $0x48] sm:$0xff]
        %v724 = vld [vmem:[#allocation5 + $0x50] sm:$0xff]
        %v725 = vld [vmem:[#allocation5 + $0x58] sm:$0xff]
        %v726 = vld [vmem:[#allocation5 + $0x60] sm:$0xff]
        %v727 = vld [vmem:[#allocation5 + $0x68] sm:$0xff]
        %v728 = vld [vmem:[#allocation5 + $0x70] sm:$0xff]
        %v729 = vld [vmem:[#allocation5 + $0x78] sm:$0xff]
        %v730 = vld [vmem:[#allocation5 + $0x80] sm:$0xff]
        %v731 = vld [vmem:[#allocation5 + $0x88] sm:$0xff]
        %v732 = vld [vmem:[#allocation5 + $0x90] sm:$0xff]
        %v733 = vld [vmem:[#allocation5 + $0x98] sm:$0xff]
        %v734 = vld [vmem:[#allocation5 + $0xa0] sm:$0xff]
        %v735 = vld [vmem:[#allocation5 + $0xa8] sm:$0xff]
        %v736 = vld [vmem:[#allocation5 + $0xb0] sm:$0xff]
        %v737 = vld [vmem:[#allocation5 + $0xb8] sm:$0xff]
        %v738 = vld [vmem:[#allocation5 + $0xc0] sm:$0xff]
        %v739 = vld [vmem:[#allocation5 + $0xc8] sm:$0xff]
        %v740 = vld [vmem:[#allocation5 + $0xd0] sm:$0xff]
        %v741 = vld [vmem:[#allocation5 + $0xd8] sm:$0xff]
        %v742 = vld [vmem:[#allocation5 + $0xe0] sm:$0xff]
        %v743 = vld [vmem:[#allocation5 + $0xe8] sm:$0xff]
        %v744 = vld [vmem:[#allocation5 + $0xf0] sm:$0xff]
        %v745 = vld [vmem:[#allocation5 + $0xf8] sm:$0xff]
        %v746 = vld [vmem:[#allocation5 + $0x100] sm:$0xff]
        %v747 = vld [vmem:[#allocation5 + $0x108] sm:$0xff]
        %v748 = vld [vmem:[#allocation5 + $0x110] sm:$0xff]
        %v749 = vld [vmem:[#allocation5 + $0x118] sm:$0xff]
        %v750 = vld [vmem:[#allocation5 + $0x120] sm:$0xff]
        %v751 = vld [vmem:[#allocation5 + $0x128] sm:$0xff]
        %v752 = vld [vmem:[#allocation5 + $0x130] sm:$0xff]
        %v753 = vld [vmem:[#allocation5 + $0x138] sm:$0xff]
        %v754 = vld [vmem:[#allocation5 + $0x140] sm:$0xff]
        %v755 = vld [vmem:[#allocation5 + $0x148] sm:$0xff]
        %v756 = vld [vmem:[#allocation5 + $0x150] sm:$0xff]
        %v757 = vld [vmem:[#allocation5 + $0x158] sm:$0xff]
        %v758 = vld [vmem:[#allocation5 + $0x160] sm:$0xff]
        %v759 = vld [vmem:[#allocation5 + $0x168] sm:$0xff]
        %v760 = vld [vmem:[#allocation5 + $0x170] sm:$0xff]
        %v761 = vld [vmem:[#allocation5 + $0x178] sm:$0xff]
        %v762 = vld [vmem:[#allocation5 + $0x180] sm:$0xff]
        %v763 = vld [vmem:[#allocation5 + $0x188] sm:$0xff]
        %v764 = vld [vmem:[#allocation5 + $0x190] sm:$0xff]
        %v765 = vld [vmem:[#allocation5 + $0x198] sm:$0xff]
        %v766 = vld [vmem:[#allocation5 + $0x1a0] sm:$0xff]
        %v767 = vld [vmem:[#allocation5 + $0x1a8] sm:$0xff]
        %v768 = vld [vmem:[#allocation5 + $0x1b0] sm:$0xff]
        %v769 = vld [vmem:[#allocation5 + $0x1b8] sm:$0xff]
        %v770 = vld [vmem:[#allocation5 + $0x1c0] sm:$0xff]
        %v771 = vld [vmem:[#allocation5 + $0x1c8] sm:$0xff]
        %v772 = vld [vmem:[#allocation5 + $0x1d0] sm:$0xff]
        %v773 = vld [vmem:[#allocation5 + $0x1d8] sm:$0xff]
        %v774 = vld [vmem:[#allocation5 + $0x1e0] sm:$0xff]
        %v775 = vld [vmem:[#allocation5 + $0x1e8] sm:$0xff]
        %v776 = vld [vmem:[#allocation5 + $0x1f0] sm:$0xff]
        %v777 = vld [vmem:[#allocation5 + $0x1f8] sm:$0xff]
        %778 = vmatpush.msra.mxu0 %v774
        %779 = vmatpush.msra.mxu0 %v770
        %780 = vmatpush.msra.mxu0 %v766
        %781 = vmatpush.msra.mxu0 %v762
        %782 = vmatpush.msra.mxu0 %v758
        %783 = vmatpush.msra.mxu0 %v754
        %784 = vmatpush.msra.mxu0 %v750
        %785 = vmatpush.msra.mxu0 %v746
        %786 = vmatpush.msra.mxu0 %v742
        %787 = vmatpush.msra.mxu0 %v738
        %788 = vmatpush.msra.mxu0 %v734
        %789 = vmatpush.msra.mxu0 %v730
        %790 = vmatpush.msra.mxu0 %v726
        %791 = vmatpush.msra.mxu0 %v722
        %792 = vmatpush.msra.mxu0 %v718
        %793 = vmatpush.msra.mxu0 %v714
        %794 = vmatmul.f32.gmra.mxu0 %v705
        %v795 = vpop.f32.mrf.mxu0
        %v796 = vadd.f32 0.0, %v795
        %797 = vdwg.mxu0
        %798 = vmatpush.msra.mxu0 %v775
        %799 = vmatpush.msra.mxu0 %v771
        %800 = vmatpush.msra.mxu0 %v767
        %801 = vmatpush.msra.mxu0 %v763
        %802 = vmatpush.msra.mxu0 %v759
        %803 = vmatpush.msra.mxu0 %v755
        %804 = vmatpush.msra.mxu0 %v751
        %805 = vmatpush.msra.mxu0 %v747
        %806 = vmatpush.msra.mxu0 %v743
        %807 = vmatpush.msra.mxu0 %v739
        %808 = vmatpush.msra.mxu0 %v735
        %809 = vmatpush.msra.mxu0 %v731
        %810 = vmatpush.msra.mxu0 %v727
        %811 = vmatpush.msra.mxu0 %v723
        %812 = vmatpush.msra.mxu0 %v719
        %813 = vmatpush.msra.mxu0 %v715
        %814 = vmatmul.f32.gmra.mxu0 %v705
        %v815 = vpop.f32.mrf.mxu0
        %v816 = vadd.f32 0.0, %v815
        %817 = vdwg.mxu0
        %818 = vmatpush.msra.mxu0 %v776
        %819 = vmatpush.msra.mxu0 %v772
        %820 = vmatpush.msra.mxu0 %v768
        %821 = vmatpush.msra.mxu0 %v764
        %822 = vmatpush.msra.mxu0 %v760
        %823 = vmatpush.msra.mxu0 %v756
        %824 = vmatpush.msra.mxu0 %v752
        %825 = vmatpush.msra.mxu0 %v748
        %826 = vmatpush.msra.mxu0 %v744
        %827 = vmatpush.msra.mxu0 %v740
        %828 = vmatpush.msra.mxu0 %v736
        %829 = vmatpush.msra.mxu0 %v732
        %830 = vmatpush.msra.mxu0 %v728
        %831 = vmatpush.msra.mxu0 %v724
        %832 = vmatpush.msra.mxu0 %v720
        %833 = vmatpush.msra.mxu0 %v716
        %834 = vmatmul.f32.gmra.mxu0 %v705
        %v835 = vpop.f32.mrf.mxu0
        %v836 = vadd.f32 0.0, %v835
        %837 = vdwg.mxu0
        %838 = vmatpush.msra.mxu0 %v777
        %839 = vmatpush.msra.mxu0 %v773
        %840 = vmatpush.msra.mxu0 %v769
        %841 = vmatpush.msra.mxu0 %v765
        %842 = vmatpush.msra.mxu0 %v761
        %843 = vmatpush.msra.mxu0 %v757
        %844 = vmatpush.msra.mxu0 %v753
        %845 = vmatpush.msra.mxu0 %v749
        %846 = vmatpush.msra.mxu0 %v745
        %847 = vmatpush.msra.mxu0 %v741
        %848 = vmatpush.msra.mxu0 %v737
        %849 = vmatpush.msra.mxu0 %v733
        %850 = vmatpush.msra.mxu0 %v729
        %851 = vmatpush.msra.mxu0 %v725
        %852 = vmatpush.msra.mxu0 %v721
        %853 = vmatpush.msra.mxu0 %v717
        %854 = vmatmul.f32.gmra.mxu0 %v705
        %v855 = vpop.f32.mrf.mxu0
        %v856 = vadd.f32 0.0, %v855
        %857 = vdwg.mxu0
        %v858 = vadd.f32 %v710, %v796
        %v859 = vadd.f32 %v711, %v816
        %v860 = vadd.f32 %v712, %v836
        %v861 = vadd.f32 %v713, %v856
        %v862 = vxor.u32 %v858, 2147483648
        %v863 = vxor.u32 %v859, 2147483648
        %v864 = vxor.u32 %v860, 2147483648
        %v865 = vmul.f32 %v862, 1.442695
        %v866 = vpow.pop %v865
        %v867 = vmul.f32 %v863, 1.442695
        %v868 = vpow.pop %v867
        %v869 = vmul.f32 %v864, 1.442695
        %v870 = vpow.pop %v869
        %v871 = vadd.f32 %v866, 1.0
        %v872 = vadd.f32 %v868, 1.0
        %v873 = vadd.f32 %v870, 1.0
        %v874 = vrcp.pop %v871
        %v875 = vmul.f32 %v871, %v874
        %v876 = vsub.f32 1.0, %v875
        %v877 = vmul.f32 %v874, %v876
        %v878 = vadd.f32 %v874, %v877
        %vm879 = vweird.f32 %v871
        %vm880 = vweird.f32 %v874
        %vm881 = vmor %vm879, %vm880
        %v882 = vsel %vm881, %v874, %v878
        %v883 = vand.u32 2147483647, %v871
        %vm884 = vcmp.eq.f32.partialorder %v883, 8.507059e+37
        %v885 = vand.u32 %v871, 2147483648
        %v886 = vor.u32 1.1754944e-38, %v885
        %v887 = vsel %vm884, %v886, %v882
        %v888 = vmul.f32 1.0, %v887
        %v889 = vrcp.pop %v872
        %v890 = vmul.f32 %v872, %v889
        %v891 = vsub.f32 1.0, %v890
        %v892 = vmul.f32 %v889, %v891
        %v893 = vadd.f32 %v889, %v892
        %vm894 = vweird.f32 %v872
        %vm895 = vweird.f32 %v889
        %vm896 = vmor %vm894, %vm895
        %v897 = vsel %vm896, %v889, %v893
        %v898 = vand.u32 2147483647, %v872
        %vm899 = vcmp.eq.f32.partialorder %v898, 8.507059e+37
        %v900 = vand.u32 %v872, 2147483648
        %v901 = vor.u32 1.1754944e-38, %v900
        %v902 = vsel %vm899, %v901, %v897
        %v903 = vmul.f32 1.0, %v902
        %v904 = vrcp.pop %v873
        %v905 = vmul.f32 %v873, %v904
        %v906 = vsub.f32 1.0, %v905
        %v907 = vmul.f32 %v904, %v906
        %v908 = vadd.f32 %v904, %v907
        %vm909 = vweird.f32 %v873
        %vm910 = vweird.f32 %v904
        %vm911 = vmor %vm909, %vm910
        %v912 = vsel %vm911, %v904, %v908
        %v913 = vand.u32 2147483647, %v873
        %vm914 = vcmp.eq.f32.partialorder %v913, 8.507059e+37
        %v915 = vand.u32 %v873, 2147483648
        %v916 = vor.u32 1.1754944e-38, %v915
        %v917 = vsel %vm914, %v916, %v912
        %v918 = vmul.f32 1.0, %v917
        %v919 = vtanh.pop %v861
        %v920 = vmul.f32 %v903, %v703
        %v921 = vmul.f32 %v888, %v919
        %v922 = vadd.f32 %v920, %v921
        %v923 = vtanh.pop %v922
        %v924 = vmul.f32 %v918, %v923
        %s925 = scalar_lea.vmem %s303, 8 [#allocation10]
        %926 = vst [vmem:[%s925] sm:$0xff] %v924
        %s927 = smul.u32 2, 4
        %s928 = smul.addr %s927, 8
        %s929 = scalar_lea.vmem [#allocation2], %s928
        %v930 = vld [vmem:[%s929] sm:$0xff]
        %v931 = vld [vmem:[%s929 + $0x8] sm:$0xff]
        %v932 = vld [vmem:[%s929 + $0x10] sm:$0xff]
        %v933 = vld [vmem:[%s929 + $0x18] sm:$0xff]
        %v934 = vld [vmem:[#allocation5] sm:$0xff]
        %v935 = vld [vmem:[#allocation5 + $0x8] sm:$0xff]
        %v936 = vld [vmem:[#allocation5 + $0x10] sm:$0xff]
        %v937 = vld [vmem:[#allocation5 + $0x18] sm:$0xff]
        %v938 = vld [vmem:[#allocation5 + $0x20] sm:$0xff]
        %v939 = vld [vmem:[#allocation5 + $0x28] sm:$0xff]
        %v940 = vld [vmem:[#allocation5 + $0x30] sm:$0xff]
        %v941 = vld [vmem:[#allocation5 + $0x38] sm:$0xff]
        %v942 = vld [vmem:[#allocation5 + $0x40] sm:$0xff]
        %v943 = vld [vmem:[#allocation5 + $0x48] sm:$0xff]
        %v944 = vld [vmem:[#allocation5 + $0x50] sm:$0xff]
        %v945 = vld [vmem:[#allocation5 + $0x58] sm:$0xff]
        %v946 = vld [vmem:[#allocation5 + $0x60] sm:$0xff]
        %v947 = vld [vmem:[#allocation5 + $0x68] sm:$0xff]
        %v948 = vld [vmem:[#allocation5 + $0x70] sm:$0xff]
        %v949 = vld [vmem:[#allocation5 + $0x78] sm:$0xff]
        %v950 = vld [vmem:[#allocation5 + $0x80] sm:$0xff]
        %v951 = vld [vmem:[#allocation5 + $0x88] sm:$0xff]
        %v952 = vld [vmem:[#allocation5 + $0x90] sm:$0xff]
        %v953 = vld [vmem:[#allocation5 + $0x98] sm:$0xff]
        %v954 = vld [vmem:[#allocation5 + $0xa0] sm:$0xff]
        %v955 = vld [vmem:[#allocation5 + $0xa8] sm:$0xff]
        %v956 = vld [vmem:[#allocation5 + $0xb0] sm:$0xff]
        %v957 = vld [vmem:[#allocation5 + $0xb8] sm:$0xff]
        %v958 = vld [vmem:[#allocation5 + $0xc0] sm:$0xff]
        %v959 = vld [vmem:[#allocation5 + $0xc8] sm:$0xff]
        %v960 = vld [vmem:[#allocation5 + $0xd0] sm:$0xff]
        %v961 = vld [vmem:[#allocation5 + $0xd8] sm:$0xff]
        %v962 = vld [vmem:[#allocation5 + $0xe0] sm:$0xff]
        %v963 = vld [vmem:[#allocation5 + $0xe8] sm:$0xff]
        %v964 = vld [vmem:[#allocation5 + $0xf0] sm:$0xff]
        %v965 = vld [vmem:[#allocation5 + $0xf8] sm:$0xff]
        %v966 = vld [vmem:[#allocation5 + $0x100] sm:$0xff]
        %v967 = vld [vmem:[#allocation5 + $0x108] sm:$0xff]
        %v968 = vld [vmem:[#allocation5 + $0x110] sm:$0xff]
        %v969 = vld [vmem:[#allocation5 + $0x118] sm:$0xff]
        %v970 = vld [vmem:[#allocation5 + $0x120] sm:$0xff]
        %v971 = vld [vmem:[#allocation5 + $0x128] sm:$0xff]
        %v972 = vld [vmem:[#allocation5 + $0x130] sm:$0xff]
        %v973 = vld [vmem:[#allocation5 + $0x138] sm:$0xff]
        %v974 = vld [vmem:[#allocation5 + $0x140] sm:$0xff]
        %v975 = vld [vmem:[#allocation5 + $0x148] sm:$0xff]
        %v976 = vld [vmem:[#allocation5 + $0x150] sm:$0xff]
        %v977 = vld [vmem:[#allocation5 + $0x158] sm:$0xff]
        %v978 = vld [vmem:[#allocation5 + $0x160] sm:$0xff]
        %v979 = vld [vmem:[#allocation5 + $0x168] sm:$0xff]
        %v980 = vld [vmem:[#allocation5 + $0x170] sm:$0xff]
        %v981 = vld [vmem:[#allocation5 + $0x178] sm:$0xff]
        %v982 = vld [vmem:[#allocation5 + $0x180] sm:$0xff]
        %v983 = vld [vmem:[#allocation5 + $0x188] sm:$0xff]
        %v984 = vld [vmem:[#allocation5 + $0x190] sm:$0xff]
        %v985 = vld [vmem:[#allocation5 + $0x198] sm:$0xff]
        %v986 = vld [vmem:[#allocation5 + $0x1a0] sm:$0xff]
        %v987 = vld [vmem:[#allocation5 + $0x1a8] sm:$0xff]
        %v988 = vld [vmem:[#allocation5 + $0x1b0] sm:$0xff]
        %v989 = vld [vmem:[#allocation5 + $0x1b8] sm:$0xff]
        %v990 = vld [vmem:[#allocation5 + $0x1c0] sm:$0xff]
        %v991 = vld [vmem:[#allocation5 + $0x1c8] sm:$0xff]
        %v992 = vld [vmem:[#allocation5 + $0x1d0] sm:$0xff]
        %v993 = vld [vmem:[#allocation5 + $0x1d8] sm:$0xff]
        %v994 = vld [vmem:[#allocation5 + $0x1e0] sm:$0xff]
        %v995 = vld [vmem:[#allocation5 + $0x1e8] sm:$0xff]
        %v996 = vld [vmem:[#allocation5 + $0x1f0] sm:$0xff]
        %v997 = vld [vmem:[#allocation5 + $0x1f8] sm:$0xff]
        %998 = vmatpush.msra.mxu0 %v994
        %999 = vmatpush.msra.mxu0 %v990
        %1000 = vmatpush.msra.mxu0 %v986
        %1001 = vmatpush.msra.mxu0 %v982
        %1002 = vmatpush.msra.mxu0 %v978
        %1003 = vmatpush.msra.mxu0 %v974
        %1004 = vmatpush.msra.mxu0 %v970
        %1005 = vmatpush.msra.mxu0 %v966
        %1006 = vmatpush.msra.mxu0 %v962
        %1007 = vmatpush.msra.mxu0 %v958
        %1008 = vmatpush.msra.mxu0 %v954
        %1009 = vmatpush.msra.mxu0 %v950
        %1010 = vmatpush.msra.mxu0 %v946
        %1011 = vmatpush.msra.mxu0 %v942
        %1012 = vmatpush.msra.mxu0 %v938
        %1013 = vmatpush.msra.mxu0 %v934
        %1014 = vmatmul.f32.gmra.mxu0 %v924
        %v1015 = vpop.f32.mrf.mxu0
        %v1016 = vadd.f32 0.0, %v1015
        %1017 = vdwg.mxu0
        %1018 = vmatpush.msra.mxu0 %v995
        %1019 = vmatpush.msra.mxu0 %v991
        %1020 = vmatpush.msra.mxu0 %v987
        %1021 = vmatpush.msra.mxu0 %v983
        %1022 = vmatpush.msra.mxu0 %v979
        %1023 = vmatpush.msra.mxu0 %v975
        %1024 = vmatpush.msra.mxu0 %v971
        %1025 = vmatpush.msra.mxu0 %v967
        %1026 = vmatpush.msra.mxu0 %v963
        %1027 = vmatpush.msra.mxu0 %v959
        %1028 = vmatpush.msra.mxu0 %v955
        %1029 = vmatpush.msra.mxu0 %v951
        %1030 = vmatpush.msra.mxu0 %v947
        %1031 = vmatpush.msra.mxu0 %v943
        %1032 = vmatpush.msra.mxu0 %v939
        %1033 = vmatpush.msra.mxu0 %v935
        %1034 = vmatmul.f32.gmra.mxu0 %v924
        %v1035 = vpop.f32.mrf.mxu0
        %v1036 = vadd.f32 0.0, %v1035
        %1037 = vdwg.mxu0
        %1038 = vmatpush.msra.mxu0 %v996
        %1039 = vmatpush.msra.mxu0 %v992
        %1040 = vmatpush.msra.mxu0 %v988
        %1041 = vmatpush.msra.mxu0 %v984
        %1042 = vmatpush.msra.mxu0 %v980
        %1043 = vmatpush.msra.mxu0 %v976
        %1044 = vmatpush.msra.mxu0 %v972
        %1045 = vmatpush.msra.mxu0 %v968
        %1046 = vmatpush.msra.mxu0 %v964
        %1047 = vmatpush.msra.mxu0 %v960
        %1048 = vmatpush.msra.mxu0 %v956
        %1049 = vmatpush.msra.mxu0 %v952
        %1050 = vmatpush.msra.mxu0 %v948
        %1051 = vmatpush.msra.mxu0 %v944
        %1052 = vmatpush.msra.mxu0 %v940
        %1053 = vmatpush.msra.mxu0 %v936
        %1054 = vmatmul.f32.gmra.mxu0 %v924
        %v1055 = vpop.f32.mrf.mxu0
        %v1056 = vadd.f32 0.0, %v1055
        %1057 = vdwg.mxu0
        %1058 = vmatpush.msra.mxu0 %v997
        %1059 = vmatpush.msra.mxu0 %v993
        %1060 = vmatpush.msra.mxu0 %v989
        %1061 = vmatpush.msra.mxu0 %v985
        %1062 = vmatpush.msra.mxu0 %v981
        %1063 = vmatpush.msra.mxu0 %v977
        %1064 = vmatpush.msra.mxu0 %v973
        %1065 = vmatpush.msra.mxu0 %v969
        %1066 = vmatpush.msra.mxu0 %v965
        %1067 = vmatpush.msra.mxu0 %v961
        %1068 = vmatpush.msra.mxu0 %v957
        %1069 = vmatpush.msra.mxu0 %v953
        %1070 = vmatpush.msra.mxu0 %v949
        %1071 = vmatpush.msra.mxu0 %v945
        %1072 = vmatpush.msra.mxu0 %v941
        %1073 = vmatpush.msra.mxu0 %v937
        %1074 = vmatmul.f32.gmra.mxu0 %v924
        %v1075 = vpop.f32.mrf.mxu0
        %v1076 = vadd.f32 0.0, %v1075
        %1077 = vdwg.mxu0
        %v1078 = vadd.f32 %v930, %v1016
        %v1079 = vadd.f32 %v931, %v1036
        %v1080 = vadd.f32 %v932, %v1056
        %v1081 = vadd.f32 %v933, %v1076
        %v1082 = vxor.u32 %v1078, 2147483648
        %v1083 = vxor.u32 %v1079, 2147483648
        %v1084 = vxor.u32 %v1080, 2147483648
        %v1085 = vmul.f32 %v1082, 1.442695
        %v1086 = vpow.pop %v1085
        %v1087 = vmul.f32 %v1083, 1.442695
        %v1088 = vpow.pop %v1087
        %v1089 = vmul.f32 %v1084, 1.442695
        %v1090 = vpow.pop %v1089
        %v1091 = vadd.f32 %v1086, 1.0
        %v1092 = vadd.f32 %v1088, 1.0
        %v1093 = vadd.f32 %v1090, 1.0
        %v1094 = vrcp.pop %v1091
        %v1095 = vmul.f32 %v1091, %v1094
        %v1096 = vsub.f32 1.0, %v1095
        %v1097 = vmul.f32 %v1094, %v1096
        %v1098 = vadd.f32 %v1094, %v1097
        %vm1099 = vweird.f32 %v1091
        %vm1100 = vweird.f32 %v1094
        %vm1101 = vmor %vm1099, %vm1100
        %v1102 = vsel %vm1101, %v1094, %v1098
        %v1103 = vand.u32 2147483647, %v1091
        %vm1104 = vcmp.eq.f32.partialorder %v1103, 8.507059e+37
        %v1105 = vand.u32 %v1091, 2147483648
        %v1106 = vor.u32 1.1754944e-38, %v1105
        %v1107 = vsel %vm1104, %v1106, %v1102
        %v1108 = vmul.f32 1.0, %v1107
        %v1109 = vrcp.pop %v1092
        %v1110 = vmul.f32 %v1092, %v1109
        %v1111 = vsub.f32 1.0, %v1110
        %v1112 = vmul.f32 %v1109, %v1111
        %v1113 = vadd.f32 %v1109, %v1112
        %vm1114 = vweird.f32 %v1092
        %vm1115 = vweird.f32 %v1109
        %vm1116 = vmor %vm1114, %vm1115
        %v1117 = vsel %vm1116, %v1109, %v1113
        %v1118 = vand.u32 2147483647, %v1092
        %vm1119 = vcmp.eq.f32.partialorder %v1118, 8.507059e+37
        %v1120 = vand.u32 %v1092, 2147483648
        %v1121 = vor.u32 1.1754944e-38, %v1120
        %v1122 = vsel %vm1119, %v1121, %v1117
        %v1123 = vmul.f32 1.0, %v1122
        %v1124 = vrcp.pop %v1093
        %v1125 = vmul.f32 %v1093, %v1124
        %v1126 = vsub.f32 1.0, %v1125
        %v1127 = vmul.f32 %v1124, %v1126
        %v1128 = vadd.f32 %v1124, %v1127
        %vm1129 = vweird.f32 %v1093
        %vm1130 = vweird.f32 %v1124
        %vm1131 = vmor %vm1129, %vm1130
        %v1132 = vsel %vm1131, %v1124, %v1128
        %v1133 = vand.u32 2147483647, %v1093
        %vm1134 = vcmp.eq.f32.partialorder %v1133, 8.507059e+37
        %v1135 = vand.u32 %v1093, 2147483648
        %v1136 = vor.u32 1.1754944e-38, %v1135
        %v1137 = vsel %vm1134, %v1136, %v1132
        %v1138 = vmul.f32 1.0, %v1137
        %v1139 = vtanh.pop %v1081
        %v1140 = vmul.f32 %v1123, %v922
        %v1141 = vmul.f32 %v1108, %v1139
        %v1142 = vadd.f32 %v1140, %v1141
        %v1143 = vtanh.pop %v1142
        %v1144 = vmul.f32 %v1138, %v1143
        %s1145 = scalar_lea.vmem %s303, 16 [#allocation10]
        %1146 = vst [vmem:[%s1145] sm:$0xff] %v1144
        %s1147 = smul.u32 3, 4
        %s1148 = smul.addr %s1147, 8
        %s1149 = scalar_lea.vmem [#allocation2], %s1148
        %v1150 = vld [vmem:[%s1149] sm:$0xff]
        %v1151 = vld [vmem:[%s1149 + $0x8] sm:$0xff]
        %v1152 = vld [vmem:[%s1149 + $0x10] sm:$0xff]
        %v1153 = vld [vmem:[%s1149 + $0x18] sm:$0xff]
        %v1154 = vld [vmem:[#allocation5] sm:$0xff]
        %v1155 = vld [vmem:[#allocation5 + $0x8] sm:$0xff]
        %v1156 = vld [vmem:[#allocation5 + $0x10] sm:$0xff]
        %v1157 = vld [vmem:[#allocation5 + $0x18] sm:$0xff]
        %v1158 = vld [vmem:[#allocation5 + $0x20] sm:$0xff]
        %v1159 = vld [vmem:[#allocation5 + $0x28] sm:$0xff]
        %v1160 = vld [vmem:[#allocation5 + $0x30] sm:$0xff]
        %v1161 = vld [vmem:[#allocation5 + $0x38] sm:$0xff]
        %v1162 = vld [vmem:[#allocation5 + $0x40] sm:$0xff]
        %v1163 = vld [vmem:[#allocation5 + $0x48] sm:$0xff]
        %v1164 = vld [vmem:[#allocation5 + $0x50] sm:$0xff]
        %v1165 = vld [vmem:[#allocation5 + $0x58] sm:$0xff]
        %v1166 = vld [vmem:[#allocation5 + $0x60] sm:$0xff]
        %v1167 = vld [vmem:[#allocation5 + $0x68] sm:$0xff]
        %v1168 = vld [vmem:[#allocation5 + $0x70] sm:$0xff]
        %v1169 = vld [vmem:[#allocation5 + $0x78] sm:$0xff]
        %v1170 = vld [vmem:[#allocation5 + $0x80] sm:$0xff]
        %v1171 = vld [vmem:[#allocation5 + $0x88] sm:$0xff]
        %v1172 = vld [vmem:[#allocation5 + $0x90] sm:$0xff]
        %v1173 = vld [vmem:[#allocation5 + $0x98] sm:$0xff]
        %v1174 = vld [vmem:[#allocation5 + $0xa0] sm:$0xff]
        %v1175 = vld [vmem:[#allocation5 + $0xa8] sm:$0xff]
        %v1176 = vld [vmem:[#allocation5 + $0xb0] sm:$0xff]
        %v1177 = vld [vmem:[#allocation5 + $0xb8] sm:$0xff]
        %v1178 = vld [vmem:[#allocation5 + $0xc0] sm:$0xff]
        %v1179 = vld [vmem:[#allocation5 + $0xc8] sm:$0xff]
        %v1180 = vld [vmem:[#allocation5 + $0xd0] sm:$0xff]
        %v1181 = vld [vmem:[#allocation5 + $0xd8] sm:$0xff]
        %v1182 = vld [vmem:[#allocation5 + $0xe0] sm:$0xff]
        %v1183 = vld [vmem:[#allocation5 + $0xe8] sm:$0xff]
        %v1184 = vld [vmem:[#allocation5 + $0xf0] sm:$0xff]
        %v1185 = vld [vmem:[#allocation5 + $0xf8] sm:$0xff]
        %v1186 = vld [vmem:[#allocation5 + $0x100] sm:$0xff]
        %v1187 = vld [vmem:[#allocation5 + $0x108] sm:$0xff]
        %v1188 = vld [vmem:[#allocation5 + $0x110] sm:$0xff]
        %v1189 = vld [vmem:[#allocation5 + $0x118] sm:$0xff]
        %v1190 = vld [vmem:[#allocation5 + $0x120] sm:$0xff]
        %v1191 = vld [vmem:[#allocation5 + $0x128] sm:$0xff]
        %v1192 = vld [vmem:[#allocation5 + $0x130] sm:$0xff]
        %v1193 = vld [vmem:[#allocation5 + $0x138] sm:$0xff]
        %v1194 = vld [vmem:[#allocation5 + $0x140] sm:$0xff]
        %v1195 = vld [vmem:[#allocation5 + $0x148] sm:$0xff]
        %v1196 = vld [vmem:[#allocation5 + $0x150] sm:$0xff]
        %v1197 = vld [vmem:[#allocation5 + $0x158] sm:$0xff]
        %v1198 = vld [vmem:[#allocation5 + $0x160] sm:$0xff]
        %v1199 = vld [vmem:[#allocation5 + $0x168] sm:$0xff]
        %v1200 = vld [vmem:[#allocation5 + $0x170] sm:$0xff]
        %v1201 = vld [vmem:[#allocation5 + $0x178] sm:$0xff]
        %v1202 = vld [vmem:[#allocation5 + $0x180] sm:$0xff]
        %v1203 = vld [vmem:[#allocation5 + $0x188] sm:$0xff]
        %v1204 = vld [vmem:[#allocation5 + $0x190] sm:$0xff]
        %v1205 = vld [vmem:[#allocation5 + $0x198] sm:$0xff]
        %v1206 = vld [vmem:[#allocation5 + $0x1a0] sm:$0xff]
        %v1207 = vld [vmem:[#allocation5 + $0x1a8] sm:$0xff]
        %v1208 = vld [vmem:[#allocation5 + $0x1b0] sm:$0xff]
        %v1209 = vld [vmem:[#allocation5 + $0x1b8] sm:$0xff]
        %v1210 = vld [vmem:[#allocation5 + $0x1c0] sm:$0xff]
        %v1211 = vld [vmem:[#allocation5 + $0x1c8] sm:$0xff]
        %v1212 = vld [vmem:[#allocation5 + $0x1d0] sm:$0xff]
        %v1213 = vld [vmem:[#allocation5 + $0x1d8] sm:$0xff]
        %v1214 = vld [vmem:[#allocation5 + $0x1e0] sm:$0xff]
        %v1215 = vld [vmem:[#allocation5 + $0x1e8] sm:$0xff]
        %v1216 = vld [vmem:[#allocation5 + $0x1f0] sm:$0xff]
        %v1217 = vld [vmem:[#allocation5 + $0x1f8] sm:$0xff]
        %1218 = vmatpush.msra.mxu0 %v1214
        %1219 = vmatpush.msra.mxu0 %v1210
        %1220 = vmatpush.msra.mxu0 %v1206
        %1221 = vmatpush.msra.mxu0 %v1202
        %1222 = vmatpush.msra.mxu0 %v1198
        %1223 = vmatpush.msra.mxu0 %v1194
        %1224 = vmatpush.msra.mxu0 %v1190
        %1225 = vmatpush.msra.mxu0 %v1186
        %1226 = vmatpush.msra.mxu0 %v1182
        %1227 = vmatpush.msra.mxu0 %v1178
        %1228 = vmatpush.msra.mxu0 %v1174
        %1229 = vmatpush.msra.mxu0 %v1170
        %1230 = vmatpush.msra.mxu0 %v1166
        %1231 = vmatpush.msra.mxu0 %v1162
        %1232 = vmatpush.msra.mxu0 %v1158
        %1233 = vmatpush.msra.mxu0 %v1154
        %1234 = vmatmul.f32.gmra.mxu0 %v1144
        %v1235 = vpop.f32.mrf.mxu0
        %v1236 = vadd.f32 0.0, %v1235
        %1237 = vdwg.mxu0
        %1238 = vmatpush.msra.mxu0 %v1215
        %1239 = vmatpush.msra.mxu0 %v1211
        %1240 = vmatpush.msra.mxu0 %v1207
        %1241 = vmatpush.msra.mxu0 %v1203
        %1242 = vmatpush.msra.mxu0 %v1199
        %1243 = vmatpush.msra.mxu0 %v1195
        %1244 = vmatpush.msra.mxu0 %v1191
        %1245 = vmatpush.msra.mxu0 %v1187
        %1246 = vmatpush.msra.mxu0 %v1183
        %1247 = vmatpush.msra.mxu0 %v1179
        %1248 = vmatpush.msra.mxu0 %v1175
        %1249 = vmatpush.msra.mxu0 %v1171
        %1250 = vmatpush.msra.mxu0 %v1167
        %1251 = vmatpush.msra.mxu0 %v1163
        %1252 = vmatpush.msra.mxu0 %v1159
        %1253 = vmatpush.msra.mxu0 %v1155
        %1254 = vmatmul.f32.gmra.mxu0 %v1144
        %v1255 = vpop.f32.mrf.mxu0
        %v1256 = vadd.f32 0.0, %v1255
        %1257 = vdwg.mxu0
        %1258 = vmatpush.msra.mxu0 %v1216
        %1259 = vmatpush.msra.mxu0 %v1212
        %1260 = vmatpush.msra.mxu0 %v1208
        %1261 = vmatpush.msra.mxu0 %v1204
        %1262 = vmatpush.msra.mxu0 %v1200
        %1263 = vmatpush.msra.mxu0 %v1196
        %1264 = vmatpush.msra.mxu0 %v1192
        %1265 = vmatpush.msra.mxu0 %v1188
        %1266 = vmatpush.msra.mxu0 %v1184
        %1267 = vmatpush.msra.mxu0 %v1180
        %1268 = vmatpush.msra.mxu0 %v1176
        %1269 = vmatpush.msra.mxu0 %v1172
        %1270 = vmatpush.msra.mxu0 %v1168
        %1271 = vmatpush.msra.mxu0 %v1164
        %1272 = vmatpush.msra.mxu0 %v1160
        %1273 = vmatpush.msra.mxu0 %v1156
        %1274 = vmatmul.f32.gmra.mxu0 %v1144
        %v1275 = vpop.f32.mrf.mxu0
        %v1276 = vadd.f32 0.0, %v1275
        %1277 = vdwg.mxu0
        %1278 = vmatpush.msra.mxu0 %v1217
        %1279 = vmatpush.msra.mxu0 %v1213
        %1280 = vmatpush.msra.mxu0 %v1209
        %1281 = vmatpush.msra.mxu0 %v1205
        %1282 = vmatpush.msra.mxu0 %v1201
        %1283 = vmatpush.msra.mxu0 %v1197
        %1284 = vmatpush.msra.mxu0 %v1193
        %1285 = vmatpush.msra.mxu0 %v1189
        %1286 = vmatpush.msra.mxu0 %v1185
        %1287 = vmatpush.msra.mxu0 %v1181
        %1288 = vmatpush.msra.mxu0 %v1177
        %1289 = vmatpush.msra.mxu0 %v1173
        %1290 = vmatpush.msra.mxu0 %v1169
        %1291 = vmatpush.msra.mxu0 %v1165
        %1292 = vmatpush.msra.mxu0 %v1161
        %1293 = vmatpush.msra.mxu0 %v1157
        %1294 = vmatmul.f32.gmra.mxu0 %v1144
        %v1295 = vpop.f32.mrf.mxu0
        %v1296 = vadd.f32 0.0, %v1295
        %1297 = vdwg.mxu0
        %v1298 = vadd.f32 %v1150, %v1236
        %v1299 = vadd.f32 %v1151, %v1256
        %v1300 = vadd.f32 %v1152, %v1276
        %v1301 = vadd.f32 %v1153, %v1296
        %v1302 = vxor.u32 %v1298, 2147483648
        %v1303 = vxor.u32 %v1299, 2147483648
        %v1304 = vxor.u32 %v1300, 2147483648
        %v1305 = vmul.f32 %v1302, 1.442695
        %v1306 = vpow.pop %v1305
        %v1307 = vmul.f32 %v1303, 1.442695
        %v1308 = vpow.pop %v1307
        %v1309 = vmul.f32 %v1304, 1.442695
        %v1310 = vpow.pop %v1309
        %v1311 = vadd.f32 %v1306, 1.0
        %v1312 = vadd.f32 %v1308, 1.0
        %v1313 = vadd.f32 %v1310, 1.0
        %v1314 = vrcp.pop %v1311
        %v1315 = vmul.f32 %v1311, %v1314
        %v1316 = vsub.f32 1.0, %v1315
        %v1317 = vmul.f32 %v1314, %v1316
        %v1318 = vadd.f32 %v1314, %v1317
        %vm1319 = vweird.f32 %v1311
        %vm1320 = vweird.f32 %v1314
        %vm1321 = vmor %vm1319, %vm1320
        %v1322 = vsel %vm1321, %v1314, %v1318
        %v1323 = vand.u32 2147483647, %v1311
        %vm1324 = vcmp.eq.f32.partialorder %v1323, 8.507059e+37
        %v1325 = vand.u32 %v1311, 2147483648
        %v1326 = vor.u32 1.1754944e-38, %v1325
        %v1327 = vsel %vm1324, %v1326, %v1322
        %v1328 = vmul.f32 1.0, %v1327
        %v1329 = vrcp.pop %v1312
        %v1330 = vmul.f32 %v1312, %v1329
        %v1331 = vsub.f32 1.0, %v1330
        %v1332 = vmul.f32 %v1329, %v1331
        %v1333 = vadd.f32 %v1329, %v1332
        %vm1334 = vweird.f32 %v1312
        %vm1335 = vweird.f32 %v1329
        %vm1336 = vmor %vm1334, %vm1335
        %v1337 = vsel %vm1336, %v1329, %v1333
        %v1338 = vand.u32 2147483647, %v1312
        %vm1339 = vcmp.eq.f32.partialorder %v1338, 8.507059e+37
        %v1340 = vand.u32 %v1312, 2147483648
        %v1341 = vor.u32 1.1754944e-38, %v1340
        %v1342 = vsel %vm1339, %v1341, %v1337
        %v1343 = vmul.f32 1.0, %v1342
        %v1344 = vrcp.pop %v1313
        %v1345 = vmul.f32 %v1313, %v1344
        %v1346 = vsub.f32 1.0, %v1345
        %v1347 = vmul.f32 %v1344, %v1346
        %v1348 = vadd.f32 %v1344, %v1347
        %vm1349 = vweird.f32 %v1313
        %vm1350 = vweird.f32 %v1344
        %vm1351 = vmor %vm1349, %vm1350
        %v1352 = vsel %vm1351, %v1344, %v1348
        %v1353 = vand.u32 2147483647, %v1313
        %vm1354 = vcmp.eq.f32.partialorder %v1353, 8.507059e+37
        %v1355 = vand.u32 %v1313, 2147483648
        %v1356 = vor.u32 1.1754944e-38, %v1355
        %v1357 = vsel %vm1354, %v1356, %v1352
        %v1358 = vmul.f32 1.0, %v1357
        %v1359 = vtanh.pop %v1301
        %v1360 = vmul.f32 %v1343, %v1142
        %v1361 = vmul.f32 %v1328, %v1359
        %v1362 = vadd.f32 %v1360, %v1361
        %v1363 = vtanh.pop %v1362
        %v1364 = vmul.f32 %v1358, %v1363
        %s1365 = scalar_lea.vmem %s303, 24 [#allocation10]
        %1366 = vst [vmem:[%s1365] sm:$0xff] %v1364
        %1367 = vst [vmem:[#allocation3] sm:$0xff] %v1364
        %1368 = vst [vmem:[#allocation4] sm:$0xff] %v1362
        %p1369 = scmp.eq.s32.totalorder %s25, 1
        // Predicated region
        $region57: #{tpu_custom_call.1} parent=43 // pred_check
          %p1370 = pneg %p1369
        $region58: #{tpu_custom_call.1} parent=43 // pred_check_branch
          %1372 = sbr.rel (%p1370) target = $region60
        $region59: #{tpu_custom_call.1} parent=43 // pred_region
          %v1373 = vld [vmem:[#allocation8] sm:$0xff]
          %v1374 = vld [vmem:[#allocation8 + $0x8] sm:$0xff]
          %v1375 = vld [vmem:[#allocation8 + $0x10] sm:$0xff]
          %v1376 = vld [vmem:[#allocation8 + $0x18] sm:$0xff]
          %v1377 = vld [vmem:[#allocation8 + $0x20] sm:$0xff]
          %v1378 = vld [vmem:[#allocation8 + $0x28] sm:$0xff]
          %v1379 = vld [vmem:[#allocation8 + $0x30] sm:$0xff]
          %v1380 = vld [vmem:[#allocation8 + $0x38] sm:$0xff]
          %v1381 = vld [vmem:[#allocation8 + $0x40] sm:$0xff]
          %v1382 = vld [vmem:[#allocation8 + $0x48] sm:$0xff]
          %v1383 = vld [vmem:[#allocation8 + $0x50] sm:$0xff]
          %v1384 = vld [vmem:[#allocation8 + $0x58] sm:$0xff]
          %v1385 = vld [vmem:[#allocation8 + $0x60] sm:$0xff]
          %v1386 = vld [vmem:[#allocation8 + $0x68] sm:$0xff]
          %v1387 = vld [vmem:[#allocation8 + $0x70] sm:$0xff]
          %v1388 = vld [vmem:[#allocation8 + $0x78] sm:$0xff]
          %v1389 = vld [vmem:[%s5] sm:$0x1]
          %v1391 = vperm.slane %v1389, 0
          %1393 = vmatpush.msra.mxu0 %v1388
          %1394 = vmatpush.msra.mxu0 %v1387
          %1395 = vmatpush.msra.mxu0 %v1386
          %1396 = vmatpush.msra.mxu0 %v1385
          %1397 = vmatpush.msra.mxu0 %v1384
          %1398 = vmatpush.msra.mxu0 %v1383
          %1399 = vmatpush.msra.mxu0 %v1382
          %1400 = vmatpush.msra.mxu0 %v1381
          %1401 = vmatpush.msra.mxu0 %v1380
          %1402 = vmatpush.msra.mxu0 %v1379
          %1403 = vmatpush.msra.mxu0 %v1378
          %1404 = vmatpush.msra.mxu0 %v1377
          %1405 = vmatpush.msra.mxu0 %v1376
          %1406 = vmatpush.msra.mxu0 %v1375
          %1407 = vmatpush.msra.mxu0 %v1374
          %1408 = vmatpush.msra.mxu0 %v1373
          %1409 = vmatmul.f32.gmra.mxu0 %v1364
          %v1410 = vpop.f32.mrf.mxu0
          %v1411 = vadd.f32 %v1391, %v1410
          %1412 = vdwg.mxu0
          %v1413 = vtanh.pop %v1411
          %1414 = vst [vmem:[#allocation11] sm:$0xff] %v1413
        $region60: #{tpu_custom_call.1} parent=43 // pred_fallthru
          _
        %s1415 = sand.u32 %s164, 1
        %s1416 = scalar_lea.sflag [#allocation7], %s1415
        %s1417 = sand.u32 %s164, 1
        %s1418 = smul.addr %s1417, 32
        %s1419 = scalar_lea.vmem [#allocation10], %s1418
        // Predicated region
        $region61: #{tpu_custom_call.1} parent=43 // pred_check
          %p1420 = pneg %p174
        $region62: #{tpu_custom_call.1} parent=43 // pred_check_branch
          %1422 = sbr.rel (%p1420) target = $region64
        $region63: #{tpu_custom_call.1} parent=43 // pred_region
          %s1423 = smul.u32 4, %s25
          %1425 = vsyncadd %s1416, 0
          %s1426 = smul.addr %s1423, 8
          %s1427 = scalar_lea.hbm %s6, %s1426
          %s1428 = sshll.u32 %s1419, 4
          %s1429 = int_to_ptr.vmem [resolvable:$true] %s1428
          %s1430 = sshll.u32 %s1427, 4
          %s1431 = int_to_ptr.hbm [resolvable:$true] %s1430
          %1436 = dma.vmem_to_hbm [thread:$0]  %s1429, 512, %s1431, %s1416, 128, 128, 8
        $region64: #{tpu_custom_call.1} parent=43 // pred_fallthru
          _
        // Predicated region
        $region65: #{tpu_custom_call.1} parent=43 // pred_check
          %p1437 = pneg %p195
        $region66: #{tpu_custom_call.1} parent=43 // pred_check_branch
          %1439 = sbr.rel (%p1437) target = $region68
        $region67: #{tpu_custom_call.1} parent=43 // pred_region
          %1441 = vsyncadd [#allocation12], 0
          %s1443 = sshll.u32 [#allocation11], 4
          %s1444 = int_to_ptr.vmem [resolvable:$true] %s1443
          %s1445 = sshll.u32 %s7, 4
          %s1446 = int_to_ptr.hbm [resolvable:$true] %s1445
          %1448 = dma.vmem_to_hbm [thread:$0]  %s1444, 128, %s1446, [#allocation12]
        $region68: #{tpu_custom_call.1} parent=43 // pred_fallthru
          _
        // Predicated region
        $region69: #{tpu_custom_call.1} parent=43 // pred_check
          %p1449 = pneg %p195
        $region70: #{tpu_custom_call.1} parent=43 // pred_check_branch
          %1451 = sbr.rel (%p1449) target = $region72
        $region71: #{tpu_custom_call.1} parent=43 // pred_region
          %1453 = dma.done [#allocation12], 128
        $region72: #{tpu_custom_call.1} parent=43 // pred_fallthru
          _
      $region44: #{tpu_custom_call.1} parent=5 // pred_fallthru
        _
      %p1454 = scmp.le.s32.totalorder 2, %s20
      // Predicated region
      $region73: #{tpu_custom_call.1} parent=5 // pred_check
        %p1455 = pneg %p1454
      $region74: #{tpu_custom_call.1} parent=5 // pred_check_branch
        %1457 = sbr.rel (%p1455) target = $region76
      $region75: #{tpu_custom_call.1} parent=5 // pred_region
        %s1458 = ssub.s32 %s20, 2
        // Predicated region
        $region77: #{tpu_custom_call.1} parent=75 // pred_check
          %p1459 = pneg %p180
        $region78: #{tpu_custom_call.1} parent=75 // pred_check_branch
          %1461 = sbr.rel (%p1459) target = $region80
        $region79: #{tpu_custom_call.1} parent=75 // pred_region
          %s1462 = sand.u32 %s165, 1
          %s1463 = scalar_lea.sflag [#allocation7], %s1462
          %s1464 = sand.u32 %s165, 1
          %s1465 = smul.addr %s1464, 32
          %s1466 = scalar_lea.vmem [#allocation10], %s1465
          %1468 = dma.done %s1463, 512
        $region80: #{tpu_custom_call.1} parent=75 // pred_fallthru
          _
      $region76: #{tpu_custom_call.1} parent=5 // pred_fallthru
        _
    $region6: #{tpu_custom_call.1} parent=1 // loop_footer
      %s24 = sadd.s32 1, %s20
    $region7: #{tpu_custom_call.1} parent=1 // loop_footer_branch
      %19 = sbr.rel target = $region3
    $region8: #{tpu_custom_call.1} parent=1 // loop_exit
      _
    %1469 = vsyncpa [#allocation6], 1
    %s1470 = scalar_lea.sflag [#allocation6], 1
    %1471 = vsyncpa %s1470, 1
    %1472 = vsyncpa [#allocation9], 1
    %1473 = vsyncpa [#allocation7], 1
    %s1474 = scalar_lea.sflag [#allocation7], 1
    %1475 = vsyncpa %s1474, 1
    %1476 = vsyncpa [#allocation12], 1

</llo_original>
